<compile_context>
chip_gen: v6e
topology: v6e:2x2x1
jax: 0.10.0
libtpu: 0.0.40
codegen_flags: <defaults>
</compile_context>

<pallas_src>
import functools

import jax
import jax.numpy as jnp
from jax.experimental import pallas as pl
from jax.experimental.pallas import tpu as pltpu


def _round_up(n, m):
    return ((n + m - 1) // m) * m


def mlp_kernel(x_ref, w1_ref, b1_ref, w2_ref, b2_ref, w3_ref, b3_ref, o_ref):
    # fc1 + ReLU  (bf16 inputs, f32 accumulation / bias / activation)
    h1 = jnp.dot(x_ref[...], w1_ref[...], preferred_element_type=jnp.float32)
    h1 = jnp.maximum(h1 + b1_ref[...], 0.0)
    # fc2 + ReLU
    h2 = jnp.dot(h1.astype(w2_ref.dtype), w2_ref[...],
                 preferred_element_type=jnp.float32)
    h2 = jnp.maximum(h2 + b2_ref[...], 0.0)
    # fc3 (no activation), lane-dense padded output
    o = jnp.dot(h2.astype(w3_ref.dtype), w3_ref[...],
                preferred_element_type=jnp.float32) + b3_ref[...]
    o_ref[...] = o.astype(o_ref.dtype)


@functools.partial(jax.jit, static_argnames=("block_b",))
def densenet_tabular_forward(x, params, *, block_b=256):
    """3-layer MLP forward pass in one Pallas kernel, tiled over the batch."""
    w1, b1, w2, b2, w3, b3 = params
    B, D = x.shape
    H1 = w1.shape[1]          # 256
    H2 = w2.shape[1]          # 512
    C = w3.shape[1]           # num_classes

    # Lane-dense output: pad fc3 to a multiple of 128 lanes, slice back afterwards.
    C_pad = _round_up(C, 128)
    if C_pad != C:
        w3 = jnp.pad(w3, ((0, 0), (0, C_pad - C)))
        b3 = jnp.pad(b3, ((0, 0), (0, C_pad - C)))

    # bf16 operands for the MXU; biases stay f32 (added to the f32 accumulator).
    compute_dtype = jnp.bfloat16
    xc = x.astype(compute_dtype)
    w1c = w1.astype(compute_dtype)
    w2c = w2.astype(compute_dtype)
    w3c = w3.astype(compute_dtype)
    b1f = b1.astype(jnp.float32)
    b2f = b2.astype(jnp.float32)
    b3f = b3.astype(jnp.float32)

    # Clamp the batch tile for tiny batches; keep it a multiple of 8 sublanes.
    blk = max(8, min(_round_up(block_b, 8), _round_up(B, 8)))
    grid = (pl.cdiv(B, blk),)

    in_specs = [
        pl.BlockSpec((blk, D), lambda i: (i, 0)),       # x tile (batch-tiled)
        pl.BlockSpec((D, H1), lambda i: (0, 0)),        # W1 (resident)
        pl.BlockSpec((1, H1), lambda i: (0, 0)),        # b1
        pl.BlockSpec((H1, H2), lambda i: (0, 0)),       # W2
        pl.BlockSpec((1, H2), lambda i: (0, 0)),        # b2
        pl.BlockSpec((H2, C_pad), lambda i: (0, 0)),    # W3 (lane-padded)
        pl.BlockSpec((1, C_pad), lambda i: (0, 0)),     # b3
    ]
    out_specs = pl.BlockSpec((blk, C_pad), lambda i: (i, 0))

    flops = 2 * B * (D * H1 + H1 * H2 + H2 * C_pad)
    bytes_accessed = (
        B * D * 2                                       # x (bf16)
        + (D * H1 + H1 * H2 + H2 * C_pad) * 2           # weights (bf16)
        + (H1 + H2 + C_pad) * 4                         # biases (f32)
        + B * C_pad * 4                                 # output (f32)
    )

    out = pl.pallas_call(
        mlp_kernel,
        out_shape=jax.ShapeDtypeStruct((B, C_pad), jnp.float32),
        grid_spec=pltpu.PrefetchScalarGridSpec(
            num_scalar_prefetch=0,
            grid=grid,
            in_specs=in_specs,
            out_specs=out_specs,
        ),
        compiler_params=pltpu.CompilerParams(
            dimension_semantics=("parallel",)),
        cost_estimate=pl.CostEstimate(
            flops=flops, transcendentals=0, bytes_accessed=bytes_accessed),
    )(xc, w1c, b1f, w2c, b2f, w3c, b3f)

    return out[:, :C].astype(x.dtype)


def init_params(key, input_dim, num_classes, dtype=jnp.float32):
    """Deterministic init matching nn.Linear default (uniform +-1/sqrt(fan_in))."""
    def linear(k, fan_in, fan_out):
        kw, kb = jax.random.split(k)
        bound = 1.0 / jnp.sqrt(fan_in)
        w = jax.random.uniform(kw, (fan_in, fan_out), dtype, -bound, bound)
        b = jax.random.uniform(kb, (1, fan_out), dtype, -bound, bound)
        return w, b

    k1, k2, k3 = jax.random.split(key, 3)
    w1, b1 = linear(k1, input_dim, 256)
    w2, b2 = linear(k2, 256, 512)
    w3, b3 = linear(k3, 512, num_classes)
    return (w1, b1, w2, b2, w3, b3)


def reference_forward(x, params):
    """Precision-matched reference (bf16 matmul operands, f32 accumulation)."""
    w1, b1, w2, b2, w3, b3 = params
    cd = jnp.bfloat16
    h = jnp.dot(x.astype(cd), w1.astype(cd), preferred_element_type=jnp.float32)
    h = jnp.maximum(h + b1.astype(jnp.float32), 0.0)
    h = jnp.dot(h.astype(cd), w2.astype(cd), preferred_element_type=jnp.float32)
    h = jnp.maximum(h + b2.astype(jnp.float32), 0.0)
    h = jnp.dot(h.astype(cd), w3.astype(cd), preferred_element_type=jnp.float32)
    return (h + b3.astype(jnp.float32)).astype(x.dtype)


def reference_forward_f32(x, params):
    w1, b1, w2, b2, w3, b3 = params
    h = jnp.maximum(x @ w1 + b1, 0.0)
    h = jnp.maximum(h @ w2 + b2, 0.0)
    return h @ w3 + b3


if __name__ == "__main__":
    key = jax.random.PRNGKey(0)
    kx, kp = jax.random.split(key)

    batch = 512           # 2 grid steps at block_b=256 (megacore-friendly on v7x)
    input_dim = 32
    num_classes = 16

    x = jax.random.normal(kx, (batch, input_dim), jnp.float32)
    params = init_params(kp, input_dim, num_classes)

    out = densenet_tabular_forward(x, params, block_b=256)
    out = jax.block_until_ready(out)

    ref = reference_forward(x, params)          # precision-matched (bf16/f32)
    ref_f32 = reference_forward_f32(x, params)  # pure-f32 semantic reference

    assert out.shape == (batch, num_classes)
    assert jnp.allclose(out, ref, atol=1e-2, rtol=1e-2), "mismatch vs bf16 reference"
    assert jnp.allclose(out, ref_f32, atol=1e-1, rtol=1e-1), "mismatch vs f32 reference"

    print("KERNEL_OK")
</pallas_src>

<mosaic_0001>
module attributes {stable_mosaic.version = 11 : i64} {
  func.func @mlp_kernel(%arg0: i32, %arg1: memref<256x32xbf16, #tpu.memory_space<vmem>>, %arg2: memref<32x256xbf16, #tpu.memory_space<vmem>>, %arg3: memref<1x256xf32, #tpu.memory_space<vmem>>, %arg4: memref<256x512xbf16, #tpu.memory_space<vmem>>, %arg5: memref<1x512xf32, #tpu.memory_space<vmem>>, %arg6: memref<512x128xbf16, #tpu.memory_space<vmem>>, %arg7: memref<1x128xf32, #tpu.memory_space<vmem>>, %arg8: memref<256x128xf32, #tpu.memory_space<vmem>>) attributes {dimension_semantics = [#tpu.dimension_semantics<parallel>], iteration_bounds = array<i64: 2>, scalar_prefetch = 0 : i64, scratch_operands = 0 : i64, tpu.core_type = #tpu.core_type<tc>, window_params = [{transform_indices = @transform_0, window_bounds = array<i64: 256, 32>}, {pipeline_mode = #tpu.pipeline_mode<synchronous>, transform_indices = @transform_1, window_bounds = array<i64: 32, 256>}, {pipeline_mode = #tpu.pipeline_mode<synchronous>, transform_indices = @transform_2, window_bounds = array<i64: 1, 256>}, {pipeline_mode = #tpu.pipeline_mode<synchronous>, transform_indices = @transform_3, window_bounds = array<i64: 256, 512>}, {pipeline_mode = #tpu.pipeline_mode<synchronous>, transform_indices = @transform_4, window_bounds = array<i64: 1, 512>}, {pipeline_mode = #tpu.pipeline_mode<synchronous>, transform_indices = @transform_5, window_bounds = array<i64: 512, 128>}, {pipeline_mode = #tpu.pipeline_mode<synchronous>, transform_indices = @transform_6, window_bounds = array<i64: 1, 128>}, {transform_indices = @transform_7, window_bounds = array<i64: 256, 128>}]} {
    %c0 = arith.constant 0 : index
    %c0_0 = arith.constant 0 : index
    %0 = vector.load %arg1[%c0, %c0_0] : memref<256x32xbf16, #tpu.memory_space<vmem>>, vector<256x32xbf16>
    %c0_1 = arith.constant 0 : index
    %c0_2 = arith.constant 0 : index
    %1 = vector.load %arg2[%c0_1, %c0_2] : memref<32x256xbf16, #tpu.memory_space<vmem>>, vector<32x256xbf16>
    %cst = arith.constant dense<0.000000e+00> : vector<256x256xf32>
    %2 = tpu.matmul %0, %1, %cst {dimension_numbers = #tpu.dot_dimension_numbers<[1], [0], [0], [1], [0, 0, 1, 1], [], []>} : vector<256x32xbf16>, vector<32x256xbf16>, vector<256x256xf32> -> vector<256x256xf32>
    %c0_3 = arith.constant 0 : index
    %c0_4 = arith.constant 0 : index
    %3 = vector.load %arg3[%c0_3, %c0_4] : memref<1x256xf32, #tpu.memory_space<vmem>>, vector<1x256xf32>
    %4 = vector.broadcast %3 : vector<1x256xf32> to vector<256x256xf32>
    %5 = arith.addf %2, %4 : vector<256x256xf32>
    %cst_5 = arith.constant 0.000000e+00 : f32
    %6 = vector.broadcast %cst_5 : f32 to vector<256x256xf32>
    %7 = arith.maximumf %5, %6 : vector<256x256xf32>
    %8 = arith.truncf %7 : vector<256x256xf32> to vector<256x256xbf16>
    %c0_6 = arith.constant 0 : index
    %c0_7 = arith.constant 0 : index
    %9 = vector.load %arg4[%c0_6, %c0_7] : memref<256x512xbf16, #tpu.memory_space<vmem>>, vector<256x512xbf16>
    %cst_8 = arith.constant dense<0.000000e+00> : vector<256x512xf32>
    %10 = tpu.matmul %8, %9, %cst_8 {dimension_numbers = #tpu.dot_dimension_numbers<[1], [0], [0], [1], [0, 0, 1, 1], [], []>} : vector<256x256xbf16>, vector<256x512xbf16>, vector<256x512xf32> -> vector<256x512xf32>
    %c0_9 = arith.constant 0 : index
    %c0_10 = arith.constant 0 : index
    %11 = vector.load %arg5[%c0_9, %c0_10] : memref<1x512xf32, #tpu.memory_space<vmem>>, vector<1x512xf32>
    %12 = vector.broadcast %11 : vector<1x512xf32> to vector<256x512xf32>
    %13 = arith.addf %10, %12 : vector<256x512xf32>
    %cst_11 = arith.constant 0.000000e+00 : f32
    %14 = vector.broadcast %cst_11 : f32 to vector<256x512xf32>
    %15 = arith.maximumf %13, %14 : vector<256x512xf32>
    %16 = arith.truncf %15 : vector<256x512xf32> to vector<256x512xbf16>
    %c0_12 = arith.constant 0 : index
    %c0_13 = arith.constant 0 : index
    %17 = vector.load %arg6[%c0_12, %c0_13] : memref<512x128xbf16, #tpu.memory_space<vmem>>, vector<512x128xbf16>
    %cst_14 = arith.constant dense<0.000000e+00> : vector<256x128xf32>
    %18 = tpu.matmul %16, %17, %cst_14 {dimension_numbers = #tpu.dot_dimension_numbers<[1], [0], [0], [1], [0, 0, 1, 1], [], []>} : vector<256x512xbf16>, vector<512x128xbf16>, vector<256x128xf32> -> vector<256x128xf32>
    %c0_15 = arith.constant 0 : index
    %c0_16 = arith.constant 0 : index
    %19 = vector.load %arg7[%c0_15, %c0_16] : memref<1x128xf32, #tpu.memory_space<vmem>>, vector<1x128xf32>
    %20 = vector.broadcast %19 : vector<1x128xf32> to vector<256x128xf32>
    %21 = arith.addf %18, %20 : vector<256x128xf32>
    %c0_17 = arith.constant 0 : index
    %c0_18 = arith.constant 0 : index
    %22 = vector.load %arg8[%c0_17, %c0_18] : memref<256x128xf32, #tpu.memory_space<vmem>>, vector<256x128xf32>
    tpu.vector_store %arg8[%c0_17, %c0_18], %21 {strides = array<i32>} : memref<256x128xf32, #tpu.memory_space<vmem>>, vector<256x128xf32>,
    return
  }
  func.func @transform_0(%arg0: i32) -> (i32, i32) {
    %c0_i32 = arith.constant 0 : i32
    %c0_i32_0 = arith.constant 0 : i32
    return %arg0, %c0_i32 : i32, i32
  }
  func.func @transform_1(%arg0: i32) -> (i32, i32) {
    %c0_i32 = arith.constant 0 : i32
    %c0_i32_0 = arith.constant 0 : i32
    %c0_i32_1 = arith.constant 0 : i32
    return %c0_i32, %c0_i32_0 : i32, i32
  }
  func.func @transform_2(%arg0: i32) -> (i32, i32) {
    %c0_i32 = arith.constant 0 : i32
    %c0_i32_0 = arith.constant 0 : i32
    %c0_i32_1 = arith.constant 0 : i32
    return %c0_i32, %c0_i32_0 : i32, i32
  }
  func.func @transform_3(%arg0: i32) -> (i32, i32) {
    %c0_i32 = arith.constant 0 : i32
    %c0_i32_0 = arith.constant 0 : i32
    %c0_i32_1 = arith.constant 0 : i32
    return %c0_i32, %c0_i32_0 : i32, i32
  }
  func.func @transform_4(%arg0: i32) -> (i32, i32) {
    %c0_i32 = arith.constant 0 : i32
    %c0_i32_0 = arith.constant 0 : i32
    %c0_i32_1 = arith.constant 0 : i32
    return %c0_i32, %c0_i32_0 : i32, i32
  }
  func.func @transform_5(%arg0: i32) -> (i32, i32) {
    %c0_i32 = arith.constant 0 : i32
    %c0_i32_0 = arith.constant 0 : i32
    %c0_i32_1 = arith.constant 0 : i32
    return %c0_i32, %c0_i32_0 : i32, i32
  }
  func.func @transform_6(%arg0: i32) -> (i32, i32) {
    %c0_i32 = arith.constant 0 : i32
    %c0_i32_0 = arith.constant 0 : i32
    %c0_i32_1 = arith.constant 0 : i32
    return %c0_i32, %c0_i32_0 : i32, i32
  }
  func.func @transform_7(%arg0: i32) -> (i32, i32) {
    %c0_i32 = arith.constant 0 : i32
    %c0_i32_0 = arith.constant 0 : i32
    return %arg0, %c0_i32 : i32, i32
  }
}

</mosaic_0001>

<llo_original>
// kernel: densenet_tabular_forward.1
$region0: #{densenet_tabular_forward.1}
  #allocation0 [shape = 'u32[]', space=smem, size = 0x4, offset = 0x4, fixed_abs, tag = 'smem constant byte address 0x4 - core index']
  #allocation1 [shape = 'u32[144,128]{1,0:T(1,128)}', space=vmem, size = 0x12000, scoped, tag = 'internal scratch']
  %s0 = inlined_call_operand.vmem [shape: bf16[512,32], index: 0, kind: input, shape index: {}]
  %s1 = inlined_call_operand.vmem [shape: bf16[32,256], index: 1, kind: input, shape index: {}]
  %s2 = inlined_call_operand.vmem [shape: f32[1,256], index: 2, kind: input, shape index: {}]
  %s3 = inlined_call_operand.vmem [shape: bf16[256,512], index: 3, kind: input, shape index: {}]
  %s4 = inlined_call_operand.vmem [shape: f32[1,512], index: 4, kind: input, shape index: {}]
  %s5 = inlined_call_operand.vmem [shape: bf16[512,128], index: 5, kind: input, shape index: {}]
  %s6 = inlined_call_operand.vmem [shape: f32[1,128], index: 6, kind: input, shape index: {}]
  %s7 = inlined_call_operand.vmem [shape: f32[512,128], index: 7, kind: output, shape index: {}]
  %s8 = sld [smem:[#allocation0]]
  $region61: #{densenet_tabular_forward.1} parent=0
    _
  %s10 = ssub.s32 1, %s8
  %s11 = scalar_select 0, %s10, %s8
  loop: start=0, step=1, limit=4
  $region2: #{densenet_tabular_forward.1} parent=0 // loop_pre_header
    _
  $region3: #{densenet_tabular_forward.1} parent=0 // loop_header
    %s13 = sphi 0, %s17
    %p14 = scmp.ge.s32.totalorder %s13, 4
    %s23 = sphi 0, %s25
    %s26 = sphi 0, %s23
    %s27 = sphi 0, %s26
    %s43 = sphi 0, %s27
    %s47 = sphi 0, %s47
    %s49 = sphi 0, %s47
    %s50 = sphi 0, %s49
    %s64 = sphi 0, %s50
    %s68 = sphi 0, %s68
    %s70 = sphi 0, %s68
    %s71 = sphi 0, %s70
    %s85 = sphi 0, %s71
    %s89 = sphi 0, %s89
    %s91 = sphi 0, %s89
    %s92 = sphi 0, %s91
    %s106 = sphi 0, %s92
    %s110 = sphi 0, %s110
    %s112 = sphi 0, %s110
    %s113 = sphi 0, %s112
    %s127 = sphi 0, %s113
    %s131 = sphi 0, %s131
    %s133 = sphi 0, %s131
    %s134 = sphi 0, %s133
    %s148 = sphi 0, %s134
    %s152 = sphi 0, %s152
    %s154 = sphi 0, %s152
    %s155 = sphi 0, %s154
    %s169 = sphi 0, %s155
    %s175 = sphi 0, %s177
    %s178 = sphi 0, %s175
    %s179 = sphi 0, %s178
    %s195 = sphi 0, %s179
  $region4: #{densenet_tabular_forward.1} parent=0 // loop_header_branch
    %16 = sbr.rel (%p14) target = $region8
  $region5: #{densenet_tabular_forward.1} parent=0 // loop_body
    %s18 = ssub.s32 %s13, 1
    %s19 = ssub.s32 %s13, 2
    %s20 = sadd.s32 %s13, 1
    %s21 = ssub.s32 %s13, %s20
    %p22 = scmp.eq.s32.totalorder %s21, 0
    %s24 = sadd.s32 %s23, 1
    %s25 = scalar_select %p22, %s23, %s24
    %p28 = pneg %p22
    %p29 = scmp.eq.s32.totalorder %s13, 1
    %p30 = por %p28, %p29
    %p31 = scmp.ne.s32.totalorder %s23, %s26
    %p32 = scmp.eq.s32.totalorder %s13, 0
    %p33 = por %p31, %p32
    %p34 = scmp.ne.s32.totalorder %s23, %s26
    %p35 = scmp.eq.s32.totalorder %s18, 1
    %p36 = por %p34, %p35
    %p37 = scmp.ne.s32.totalorder %s26, %s27
    %p38 = scmp.eq.s32.totalorder %s18, 0
    %p39 = por %p37, %p38
    %p40 = scmp.ne.s32.totalorder %s26, %s27
    %p41 = scmp.eq.s32.totalorder %s19, 1
    %p42 = por %p40, %p41
    %p44 = scmp.ne.s32.totalorder %s27, %s43
    %p45 = scmp.eq.s32.totalorder %s19, 0
    %p46 = por %p44, %p45
    %s48 = sadd.s32 %s47, 1
    %p51 = scmp.eq.s32.totalorder %s13, 1
    %p52 = scmp.ne.s32.totalorder %s47, %s49
    %p53 = scmp.eq.s32.totalorder %s13, 0
    %p54 = por %p52, %p53
    %p55 = scmp.ne.s32.totalorder %s47, %s49
    %p56 = scmp.eq.s32.totalorder %s18, 1
    %p57 = por %p55, %p56
    %p58 = scmp.ne.s32.totalorder %s49, %s50
    %p59 = scmp.eq.s32.totalorder %s18, 0
    %p60 = por %p58, %p59
    %p61 = scmp.ne.s32.totalorder %s49, %s50
    %p62 = scmp.eq.s32.totalorder %s19, 1
    %p63 = por %p61, %p62
    %p65 = scmp.ne.s32.totalorder %s50, %s64
    %p66 = scmp.eq.s32.totalorder %s19, 0
    %p67 = por %p65, %p66
    %s69 = sadd.s32 %s68, 1
    %p72 = scmp.eq.s32.totalorder %s13, 1
    %p73 = scmp.ne.s32.totalorder %s68, %s70
    %p74 = scmp.eq.s32.totalorder %s13, 0
    %p75 = por %p73, %p74
    %p76 = scmp.ne.s32.totalorder %s68, %s70
    %p77 = scmp.eq.s32.totalorder %s18, 1
    %p78 = por %p76, %p77
    %p79 = scmp.ne.s32.totalorder %s70, %s71
    %p80 = scmp.eq.s32.totalorder %s18, 0
    %p81 = por %p79, %p80
    %p82 = scmp.ne.s32.totalorder %s70, %s71
    %p83 = scmp.eq.s32.totalorder %s19, 1
    %p84 = por %p82, %p83
    %p86 = scmp.ne.s32.totalorder %s71, %s85
    %p87 = scmp.eq.s32.totalorder %s19, 0
    %p88 = por %p86, %p87
    %s90 = sadd.s32 %s89, 1
    %p93 = scmp.eq.s32.totalorder %s13, 1
    %p94 = scmp.ne.s32.totalorder %s89, %s91
    %p95 = scmp.eq.s32.totalorder %s13, 0
    %p96 = por %p94, %p95
    %p97 = scmp.ne.s32.totalorder %s89, %s91
    %p98 = scmp.eq.s32.totalorder %s18, 1
    %p99 = por %p97, %p98
    %p100 = scmp.ne.s32.totalorder %s91, %s92
    %p101 = scmp.eq.s32.totalorder %s18, 0
    %p102 = por %p100, %p101
    %p103 = scmp.ne.s32.totalorder %s91, %s92
    %p104 = scmp.eq.s32.totalorder %s19, 1
    %p105 = por %p103, %p104
    %p107 = scmp.ne.s32.totalorder %s92, %s106
    %p108 = scmp.eq.s32.totalorder %s19, 0
    %p109 = por %p107, %p108
    %s111 = sadd.s32 %s110, 1
    %p114 = scmp.eq.s32.totalorder %s13, 1
    %p115 = scmp.ne.s32.totalorder %s110, %s112
    %p116 = scmp.eq.s32.totalorder %s13, 0
    %p117 = por %p115, %p116
    %p118 = scmp.ne.s32.totalorder %s110, %s112
    %p119 = scmp.eq.s32.totalorder %s18, 1
    %p120 = por %p118, %p119
    %p121 = scmp.ne.s32.totalorder %s112, %s113
    %p122 = scmp.eq.s32.totalorder %s18, 0
    %p123 = por %p121, %p122
    %p124 = scmp.ne.s32.totalorder %s112, %s113
    %p125 = scmp.eq.s32.totalorder %s19, 1
    %p126 = por %p124, %p125
    %p128 = scmp.ne.s32.totalorder %s113, %s127
    %p129 = scmp.eq.s32.totalorder %s19, 0
    %p130 = por %p128, %p129
    %s132 = sadd.s32 %s131, 1
    %p135 = scmp.eq.s32.totalorder %s13, 1
    %p136 = scmp.ne.s32.totalorder %s131, %s133
    %p137 = scmp.eq.s32.totalorder %s13, 0
    %p138 = por %p136, %p137
    %p139 = scmp.ne.s32.totalorder %s131, %s133
    %p140 = scmp.eq.s32.totalorder %s18, 1
    %p141 = por %p139, %p140
    %p142 = scmp.ne.s32.totalorder %s133, %s134
    %p143 = scmp.eq.s32.totalorder %s18, 0
    %p144 = por %p142, %p143
    %p145 = scmp.ne.s32.totalorder %s133, %s134
    %p146 = scmp.eq.s32.totalorder %s19, 1
    %p147 = por %p145, %p146
    %p149 = scmp.ne.s32.totalorder %s134, %s148
    %p150 = scmp.eq.s32.totalorder %s19, 0
    %p151 = por %p149, %p150
    %s153 = sadd.s32 %s152, 1
    %p156 = scmp.eq.s32.totalorder %s13, 1
    %p157 = scmp.ne.s32.totalorder %s152, %s154
    %p158 = scmp.eq.s32.totalorder %s13, 0
    %p159 = por %p157, %p158
    %p160 = scmp.ne.s32.totalorder %s152, %s154
    %p161 = scmp.eq.s32.totalorder %s18, 1
    %p162 = por %p160, %p161
    %p163 = scmp.ne.s32.totalorder %s154, %s155
    %p164 = scmp.eq.s32.totalorder %s18, 0
    %p165 = por %p163, %p164
    %p166 = scmp.ne.s32.totalorder %s154, %s155
    %p167 = scmp.eq.s32.totalorder %s19, 1
    %p168 = por %p166, %p167
    %p170 = scmp.ne.s32.totalorder %s155, %s169
    %p171 = scmp.eq.s32.totalorder %s19, 0
    %p172 = por %p170, %p171
    %s173 = ssub.s32 %s13, %s20
    %p174 = scmp.eq.s32.totalorder %s173, 0
    %s176 = sadd.s32 %s175, 1
    %s177 = scalar_select %p174, %s175, %s176
    %p180 = pneg %p174
    %p181 = scmp.eq.s32.totalorder %s13, 1
    %p182 = por %p180, %p181
    %p183 = scmp.ne.s32.totalorder %s175, %s178
    %p184 = scmp.eq.s32.totalorder %s13, 0
    %p185 = por %p183, %p184
    %p186 = scmp.ne.s32.totalorder %s175, %s178
    %p187 = scmp.eq.s32.totalorder %s18, 1
    %p188 = por %p186, %p187
    %p189 = scmp.ne.s32.totalorder %s178, %s179
    %p190 = scmp.eq.s32.totalorder %s18, 0
    %p191 = por %p189, %p190
    %p192 = scmp.ne.s32.totalorder %s178, %s179
    %p193 = scmp.eq.s32.totalorder %s19, 1
    %p194 = por %p192, %p193
    %p196 = scmp.ne.s32.totalorder %s179, %s195
    %p197 = scmp.eq.s32.totalorder %s19, 0
    %p198 = por %p196, %p197
    %p199 = scmp.le.s32.totalorder 1, %s13
    %p200 = scmp.lt.s32.totalorder %s13, 3
    %p201 = pnand %p199, %p200
    %p202 = pneg %p201
    // Predicated region
    $region9: #{densenet_tabular_forward.1} parent=5 // pred_check
      _
    $region10: #{densenet_tabular_forward.1} parent=5 // pred_check_branch
      %204 = sbr.rel (%p201) target = $region12
    $region11: #{densenet_tabular_forward.1} parent=5 // pred_region
      %s205 = ssub.s32 %s13, 1
      // Predicated region
      $region13: #{densenet_tabular_forward.1} parent=11 // pred_check
        %p206 = pneg %p60
      $region14: #{densenet_tabular_forward.1} parent=11 // pred_check_branch
        %208 = sbr.rel (%p206) target = $region16
      $region15: #{densenet_tabular_forward.1} parent=11 // pred_region
        _
      $region16: #{densenet_tabular_forward.1} parent=11 // pred_fallthru
        _
      // Predicated region
      $region17: #{densenet_tabular_forward.1} parent=11 // pred_check
        %p209 = pneg %p81
      $region18: #{densenet_tabular_forward.1} parent=11 // pred_check_branch
        %211 = sbr.rel (%p209) target = $region20
      $region19: #{densenet_tabular_forward.1} parent=11 // pred_region
        _
      $region20: #{densenet_tabular_forward.1} parent=11 // pred_fallthru
        _
      // Predicated region
      $region21: #{densenet_tabular_forward.1} parent=11 // pred_check
        %p212 = pneg %p102
      $region22: #{densenet_tabular_forward.1} parent=11 // pred_check_branch
        %214 = sbr.rel (%p212) target = $region24
      $region23: #{densenet_tabular_forward.1} parent=11 // pred_region
        _
      $region24: #{densenet_tabular_forward.1} parent=11 // pred_fallthru
        _
      // Predicated region
      $region25: #{densenet_tabular_forward.1} parent=11 // pred_check
        %p215 = pneg %p123
      $region26: #{densenet_tabular_forward.1} parent=11 // pred_check_branch
        %217 = sbr.rel (%p215) target = $region28
      $region27: #{densenet_tabular_forward.1} parent=11 // pred_region
        _
      $region28: #{densenet_tabular_forward.1} parent=11 // pred_fallthru
        _
      // Predicated region
      $region29: #{densenet_tabular_forward.1} parent=11 // pred_check
        %p218 = pneg %p144
      $region30: #{densenet_tabular_forward.1} parent=11 // pred_check_branch
        %220 = sbr.rel (%p218) target = $region32
      $region31: #{densenet_tabular_forward.1} parent=11 // pred_region
        _
      $region32: #{densenet_tabular_forward.1} parent=11 // pred_fallthru
        _
      // Predicated region
      $region33: #{densenet_tabular_forward.1} parent=11 // pred_check
        %p221 = pneg %p165
      $region34: #{densenet_tabular_forward.1} parent=11 // pred_check_branch
        %223 = sbr.rel (%p221) target = $region36
      $region35: #{densenet_tabular_forward.1} parent=11 // pred_region
        _
      $region36: #{densenet_tabular_forward.1} parent=11 // pred_fallthru
        _
    $region12: #{densenet_tabular_forward.1} parent=5 // pred_fallthru
      _
    %p224 = scmp.lt.s32.totalorder %s13, 2
    // Predicated region
    $region37: #{densenet_tabular_forward.1} parent=5 // pred_check
      %p225 = pneg %p224
    $region38: #{densenet_tabular_forward.1} parent=5 // pred_check_branch
      %227 = sbr.rel (%p225) target = $region40
    $region39: #{densenet_tabular_forward.1} parent=5 // pred_region
      // Predicated region
      $region41: #{densenet_tabular_forward.1} parent=39 // pred_check
        %p228 = pneg %p33
      $region42: #{densenet_tabular_forward.1} parent=39 // pred_check_branch
        %230 = sbr.rel (%p228) target = $region44
      $region43: #{densenet_tabular_forward.1} parent=39 // pred_region
        %s231 = smul.u32 32, %s13
        %p232 = scmp.lt.s32.totalorder %s231, 63
        %s233 = scalar_select %p232, %s231, 63
        %s234 = smul.addr %s233, 4
        %s235 = scalar_lea.vmem %s0, %s234
        %s236 = smul.u32 32, %s13
      $region44: #{densenet_tabular_forward.1} parent=39 // pred_fallthru
        _
    $region40: #{densenet_tabular_forward.1} parent=5 // pred_fallthru
      _
    %p237 = scmp.le.s32.totalorder 1, %s13
    %p238 = scmp.lt.s32.totalorder %s13, 3
    %p239 = pnand %p237, %p238
    %p240 = pneg %p239
    // Predicated region
    $region45: #{densenet_tabular_forward.1} parent=5 // pred_check
      _
    $region46: #{densenet_tabular_forward.1} parent=5 // pred_check_branch
      %242 = sbr.rel (%p239) target = $region48
    $region47: #{densenet_tabular_forward.1} parent=5 // pred_region
      %s243 = ssub.s32 %s13, 1
      %s244 = smul.u32 32, %s18
      %p245 = scmp.lt.s32.totalorder %s244, 63
      %s246 = scalar_select %p245, %s244, 63
      %s247 = smul.addr %s246, 4
      %s248 = scalar_lea.vmem %s0, %s247
      %p249 = pneg %p39
      %p250 = pneg %p36
      %p251 = pneg %p60
      %p252 = pneg %p57
      %p253 = pneg %p81
      %p254 = pneg %p78
      %p255 = pneg %p102
      %p256 = pneg %p99
      %p257 = pneg %p123
      %p258 = pneg %p120
      %p259 = pneg %p144
      %p260 = pneg %p141
      %p261 = pneg %p165
      %p262 = pneg %p162
      %p263 = pneg %p191
      %p264 = pneg %p188
      %s265 = smul.u32 32, %s18
      %p266 = scmp.lt.s32.totalorder %s265, 63
      %s267 = scalar_select %p266, %s265, 63
      %s268 = smul.addr %s267, 8
      %s269 = scalar_lea.vmem %s7, %s268
      %s270 = smul.u32 32, %s18
      %p271 = scmp.lt.s32.totalorder %s270, 63
      %s272 = scalar_select %p271, %s270, 63
      %s273 = smul.addr %s272, 4
      %s274 = scalar_lea.vmem %s0, %s273
      %s275 = smul.u32 32, %s18
      %s276 = smul.u32 32, %s18
      %p277 = scmp.lt.s32.totalorder %s276, 63
      %s278 = scalar_select %p277, %s276, 63
      %s279 = smul.addr %s278, 8
      %s280 = scalar_lea.vmem %s7, %s279
      %s281 = smul.u32 32, %s18
      %v283 = vld [vmem:[%s274] sm:$0xf]
      %v284 = vld [vmem:[%s274 + $0x4] sm:$0xf]
      %v285 = vld [vmem:[%s274 + $0x8] sm:$0xf]
      %v286 = vld [vmem:[%s274 + $0xc] sm:$0xf]
      %v287 = vld [vmem:[%s274 + $0x10] sm:$0xf]
      %v288 = vld [vmem:[%s274 + $0x14] sm:$0xf]
      %v289 = vld [vmem:[%s274 + $0x18] sm:$0xf]
      %v290 = vld [vmem:[%s274 + $0x1c] sm:$0xf]
      %v291 = vld [vmem:[%s274 + $0x20] sm:$0xf]
      %v292 = vld [vmem:[%s274 + $0x24] sm:$0xf]
      %v293 = vld [vmem:[%s274 + $0x28] sm:$0xf]
      %v294 = vld [vmem:[%s274 + $0x2c] sm:$0xf]
      %v295 = vld [vmem:[%s274 + $0x30] sm:$0xf]
      %v296 = vld [vmem:[%s274 + $0x34] sm:$0xf]
      %v297 = vld [vmem:[%s274 + $0x38] sm:$0xf]
      %v298 = vld [vmem:[%s274 + $0x3c] sm:$0xf]
      %v299 = vld [vmem:[%s274 + $0x40] sm:$0xf]
      %v300 = vld [vmem:[%s274 + $0x44] sm:$0xf]
      %v301 = vld [vmem:[%s274 + $0x48] sm:$0xf]
      %v302 = vld [vmem:[%s274 + $0x4c] sm:$0xf]
      %v303 = vld [vmem:[%s274 + $0x50] sm:$0xf]
      %v304 = vld [vmem:[%s274 + $0x54] sm:$0xf]
      %v305 = vld [vmem:[%s274 + $0x58] sm:$0xf]
      %v306 = vld [vmem:[%s274 + $0x5c] sm:$0xf]
      %v307 = vld [vmem:[%s274 + $0x60] sm:$0xf]
      %v308 = vld [vmem:[%s274 + $0x64] sm:$0xf]
      %v309 = vld [vmem:[%s274 + $0x68] sm:$0xf]
      %v310 = vld [vmem:[%s274 + $0x6c] sm:$0xf]
      %v311 = vld [vmem:[%s274 + $0x70] sm:$0xf]
      %v312 = vld [vmem:[%s274 + $0x74] sm:$0xf]
      %v313 = vld [vmem:[%s274 + $0x78] sm:$0xf]
      %v314 = vld [vmem:[%s274 + $0x7c] sm:$0xf]
      %v315 = vld [vmem:[%s1] sm:$0xff]
      %v316 = vld [vmem:[%s1 + $0x8] sm:$0xff]
      %v317 = vld [vmem:[%s1 + $0x10] sm:$0xff]
      %v318 = vld [vmem:[%s1 + $0x18] sm:$0xff]
      %v319 = vld [vmem:[%s2] sm:$0x3]
      %v321 = vlaneseq
      %v322 = vshrl.u32 %v321, 7
      %v323 = vsub.s32 0, %v322
      %v324 = vrot.slane %v319, %v323
      %v325 = vlaneseq
      %v326 = vshrl.u32 %v325, 7
      %v327 = vsub.s32 1, %v326
      %v328 = vrot.slane %v319, %v327
      %v363 = vunpack.c.l.b16 %v283
      %v364 = vunpack.c.l.b16 %v284
      %v365 = vunpack.c.l.b16 %v285
      %v366 = vunpack.c.l.b16 %v286
      %v367 = vunpack.c.l.b16 %v287
      %v368 = vunpack.c.l.b16 %v288
      %v369 = vunpack.c.l.b16 %v289
      %v370 = vunpack.c.l.b16 %v290
      %v371 = vunpack.c.l.b16 %v291
      %v372 = vunpack.c.l.b16 %v292
      %v373 = vunpack.c.l.b16 %v293
      %v374 = vunpack.c.l.b16 %v294
      %v375 = vunpack.c.l.b16 %v295
      %v376 = vunpack.c.l.b16 %v296
      %v377 = vunpack.c.l.b16 %v297
      %v378 = vunpack.c.l.b16 %v298
      %v379 = vunpack.c.l.b16 %v299
      %v380 = vunpack.c.l.b16 %v300
      %v381 = vunpack.c.l.b16 %v301
      %v382 = vunpack.c.l.b16 %v302
      %v383 = vunpack.c.l.b16 %v303
      %v384 = vunpack.c.l.b16 %v304
      %v385 = vunpack.c.l.b16 %v305
      %v386 = vunpack.c.l.b16 %v306
      %v387 = vunpack.c.l.b16 %v307
      %v388 = vunpack.c.l.b16 %v308
      %v389 = vunpack.c.l.b16 %v309
      %v390 = vunpack.c.l.b16 %v310
      %v391 = vunpack.c.l.b16 %v311
      %v392 = vunpack.c.l.b16 %v312
      %v393 = vunpack.c.l.b16 %v313
      %v394 = vunpack.c.l.b16 %v314
      %v395 = vpack.c.b16 %v364, %v363
      %v396 = vpack.c.b16 %v366, %v365
      %v397 = vpack.c.b16 %v368, %v367
      %v398 = vpack.c.b16 %v370, %v369
      %v399 = vpack.c.b16 %v372, %v371
      %v400 = vpack.c.b16 %v374, %v373
      %v401 = vpack.c.b16 %v376, %v375
      %v402 = vpack.c.b16 %v378, %v377
      %v403 = vpack.c.b16 %v380, %v379
      %v404 = vpack.c.b16 %v382, %v381
      %v405 = vpack.c.b16 %v384, %v383
      %v406 = vpack.c.b16 %v386, %v385
      %v407 = vpack.c.b16 %v388, %v387
      %v408 = vpack.c.b16 %v390, %v389
      %v409 = vpack.c.b16 %v392, %v391
      %v410 = vpack.c.b16 %v394, %v393
      %v415 = vunpack.c.l.b16 %v315
      %v416 = vunpack.c.h.b16 %v315
      %v417 = vunpack.c.l.b16 %v316
      %v418 = vunpack.c.h.b16 %v316
      %v419 = vunpack.c.l.b16 %v317
      %v420 = vunpack.c.h.b16 %v317
      %v421 = vunpack.c.l.b16 %v318
      %v422 = vunpack.c.h.b16 %v318
      %v423 = vpack.c.b16 %v417, %v415
      %v424 = vpack.c.b16 %v418, %v416
      %v425 = vpack.c.b16 %v421, %v419
      %v426 = vpack.c.b16 %v422, %v420
      %vm431 = vcmask 261120
      %v433 = vsel %vm431, %v395, 0
      %v436 = vsel %vm431, %v396, 0
      %v439 = vsel %vm431, %v397, 0
      %v442 = vsel %vm431, %v398, 0
      %v445 = vsel %vm431, %v399, 0
      %v448 = vsel %vm431, %v400, 0
      %v451 = vsel %vm431, %v401, 0
      %v454 = vsel %vm431, %v402, 0
      %v457 = vsel %vm431, %v403, 0
      %v460 = vsel %vm431, %v404, 0
      %v463 = vsel %vm431, %v405, 0
      %v466 = vsel %vm431, %v406, 0
      %v469 = vsel %vm431, %v407, 0
      %v472 = vsel %vm431, %v408, 0
      %v475 = vsel %vm431, %v409, 0
      %v478 = vsel %vm431, %v410, 0
      %480 = vmatprep.subr.bf16.mxu0 0
      %481 = vmatpush1.bf16.msra.mxu0 0
      %482 = vmatprep.subr.bf16.mxu0 0
      %483 = vmatpush1.bf16.msra.mxu0 0
      %484 = vmatprep.subr.bf16.mxu0 0
      %485 = vmatpush1.bf16.msra.mxu0 0
      %486 = vmatprep.subr.bf16.mxu0 0
      %487 = vmatpush1.bf16.msra.mxu0 0
      %488 = vmatprep.subr.bf16.mxu0 0
      %489 = vmatpush1.bf16.msra.mxu0 0
      %490 = vmatprep.subr.bf16.mxu0 0
      %491 = vmatpush1.bf16.msra.mxu0 0
      %492 = vmatprep.subr.bf16.mxu0 %v426
      %493 = vmatpush1.bf16.msra.mxu0 %v425
      %494 = vmatprep.subr.bf16.mxu0 %v424
      %495 = vmatpush1.bf16.msra.mxu0 %v423
      %496 = vmatprep.subr.bf16.mxu0 0
      %497 = vmatpush2.bf16.msra.mxu0 0
      %498 = vmatprep.subr.bf16.mxu0 0
      %499 = vmatpush2.bf16.msra.mxu0 0
      %500 = vmatprep.subr.bf16.mxu0 0
      %501 = vmatpush2.bf16.msra.mxu0 0
      %502 = vmatprep.subr.bf16.mxu0 0
      %503 = vmatpush2.bf16.msra.mxu0 0
      %504 = vmatprep.subr.bf16.mxu0 0
      %505 = vmatpush2.bf16.msra.mxu0 0
      %506 = vmatprep.subr.bf16.mxu0 0
      %507 = vmatpush2.bf16.msra.mxu0 0
      %508 = vmatprep.subr.bf16.mxu0 0
      %509 = vmatpush2.bf16.msra.mxu0 0
      %510 = vmatprep.subr.bf16.mxu0 0
      %511 = vmatpush2.bf16.msra.mxu0 0
      %512 = vmatprep.mubr.bf16.mxu0 0
      %513 = vmatmul.mubr.bf16.gmra.mxu0 %v433
      %v514 = vpop.f32.mrf.mxu0
      %v515 = vadd.f32 %v324, %v514
      %v516 = vpop.f32.mrf.mxu0
      %v517 = vadd.f32 %v328, %v516
      %v518 = vpop.f32.mrf.mxu0
      %v519 = vadd.f32 %v324, %v518
      %v520 = vpop.f32.mrf.mxu0
      %v521 = vadd.f32 %v328, %v520
      %522 = vmatprep.mubr.bf16.mxu0 0
      %523 = vmatmul.mubr.bf16.gmra.mxu0 %v436
      %v524 = vpop.f32.mrf.mxu0
      %v525 = vadd.f32 %v324, %v524
      %v526 = vpop.f32.mrf.mxu0
      %v527 = vadd.f32 %v328, %v526
      %v528 = vpop.f32.mrf.mxu0
      %v529 = vadd.f32 %v324, %v528
      %v530 = vpop.f32.mrf.mxu0
      %v531 = vadd.f32 %v328, %v530
      %532 = vmatprep.mubr.bf16.mxu0 0
      %533 = vmatmul.mubr.bf16.gmra.mxu0 %v439
      %v534 = vpop.f32.mrf.mxu0
      %v535 = vadd.f32 %v324, %v534
      %v536 = vpop.f32.mrf.mxu0
      %v537 = vadd.f32 %v328, %v536
      %v538 = vpop.f32.mrf.mxu0
      %v539 = vadd.f32 %v324, %v538
      %v540 = vpop.f32.mrf.mxu0
      %v541 = vadd.f32 %v328, %v540
      %542 = vmatprep.mubr.bf16.mxu0 0
      %543 = vmatmul.mubr.bf16.gmra.mxu0 %v442
      %v544 = vpop.f32.mrf.mxu0
      %v545 = vadd.f32 %v324, %v544
      %v546 = vpop.f32.mrf.mxu0
      %v547 = vadd.f32 %v328, %v546
      %v548 = vpop.f32.mrf.mxu0
      %v549 = vadd.f32 %v324, %v548
      %v550 = vpop.f32.mrf.mxu0
      %v551 = vadd.f32 %v328, %v550
      %552 = vmatprep.mubr.bf16.mxu0 0
      %553 = vmatmul.mubr.bf16.gmra.mxu0 %v445
      %v554 = vpop.f32.mrf.mxu0
      %v555 = vadd.f32 %v324, %v554
      %v556 = vpop.f32.mrf.mxu0
      %v557 = vadd.f32 %v328, %v556
      %v558 = vpop.f32.mrf.mxu0
      %v559 = vadd.f32 %v324, %v558
      %v560 = vpop.f32.mrf.mxu0
      %v561 = vadd.f32 %v328, %v560
      %562 = vmatprep.mubr.bf16.mxu0 0
      %563 = vmatmul.mubr.bf16.gmra.mxu0 %v448
      %v564 = vpop.f32.mrf.mxu0
      %v565 = vadd.f32 %v324, %v564
      %v566 = vpop.f32.mrf.mxu0
      %v567 = vadd.f32 %v328, %v566
      %v568 = vpop.f32.mrf.mxu0
      %v569 = vadd.f32 %v324, %v568
      %v570 = vpop.f32.mrf.mxu0
      %v571 = vadd.f32 %v328, %v570
      %572 = vmatprep.mubr.bf16.mxu0 0
      %573 = vmatmul.mubr.bf16.gmra.mxu0 %v451
      %v574 = vpop.f32.mrf.mxu0
      %v575 = vadd.f32 %v324, %v574
      %v576 = vpop.f32.mrf.mxu0
      %v577 = vadd.f32 %v328, %v576
      %v578 = vpop.f32.mrf.mxu0
      %v579 = vadd.f32 %v324, %v578
      %v580 = vpop.f32.mrf.mxu0
      %v581 = vadd.f32 %v328, %v580
      %582 = vmatprep.mubr.bf16.mxu0 0
      %583 = vmatmul.mubr.bf16.gmra.mxu0 %v454
      %v584 = vpop.f32.mrf.mxu0
      %v585 = vadd.f32 %v324, %v584
      %v586 = vpop.f32.mrf.mxu0
      %v587 = vadd.f32 %v328, %v586
      %v588 = vpop.f32.mrf.mxu0
      %v589 = vadd.f32 %v324, %v588
      %v590 = vpop.f32.mrf.mxu0
      %v591 = vadd.f32 %v328, %v590
      %592 = vmatprep.mubr.bf16.mxu0 0
      %593 = vmatmul.mubr.bf16.gmra.mxu0 %v457
      %v594 = vpop.f32.mrf.mxu0
      %v595 = vadd.f32 %v324, %v594
      %v596 = vpop.f32.mrf.mxu0
      %v597 = vadd.f32 %v328, %v596
      %v598 = vpop.f32.mrf.mxu0
      %v599 = vadd.f32 %v324, %v598
      %v600 = vpop.f32.mrf.mxu0
      %v601 = vadd.f32 %v328, %v600
      %602 = vmatprep.mubr.bf16.mxu0 0
      %603 = vmatmul.mubr.bf16.gmra.mxu0 %v460
      %v604 = vpop.f32.mrf.mxu0
      %v605 = vadd.f32 %v324, %v604
      %v606 = vpop.f32.mrf.mxu0
      %v607 = vadd.f32 %v328, %v606
      %v608 = vpop.f32.mrf.mxu0
      %v609 = vadd.f32 %v324, %v608
      %v610 = vpop.f32.mrf.mxu0
      %v611 = vadd.f32 %v328, %v610
      %612 = vmatprep.mubr.bf16.mxu0 0
      %613 = vmatmul.mubr.bf16.gmra.mxu0 %v463
      %v614 = vpop.f32.mrf.mxu0
      %v615 = vadd.f32 %v324, %v614
      %v616 = vpop.f32.mrf.mxu0
      %v617 = vadd.f32 %v328, %v616
      %v618 = vpop.f32.mrf.mxu0
      %v619 = vadd.f32 %v324, %v618
      %v620 = vpop.f32.mrf.mxu0
      %v621 = vadd.f32 %v328, %v620
      %622 = vmatprep.mubr.bf16.mxu0 0
      %623 = vmatmul.mubr.bf16.gmra.mxu0 %v466
      %v624 = vpop.f32.mrf.mxu0
      %v625 = vadd.f32 %v324, %v624
      %v626 = vpop.f32.mrf.mxu0
      %v627 = vadd.f32 %v328, %v626
      %v628 = vpop.f32.mrf.mxu0
      %v629 = vadd.f32 %v324, %v628
      %v630 = vpop.f32.mrf.mxu0
      %v631 = vadd.f32 %v328, %v630
      %632 = vmatprep.mubr.bf16.mxu0 0
      %633 = vmatmul.mubr.bf16.gmra.mxu0 %v469
      %v634 = vpop.f32.mrf.mxu0
      %v635 = vadd.f32 %v324, %v634
      %v636 = vpop.f32.mrf.mxu0
      %v637 = vadd.f32 %v328, %v636
      %v638 = vpop.f32.mrf.mxu0
      %v639 = vadd.f32 %v324, %v638
      %v640 = vpop.f32.mrf.mxu0
      %v641 = vadd.f32 %v328, %v640
      %642 = vmatprep.mubr.bf16.mxu0 0
      %643 = vmatmul.mubr.bf16.gmra.mxu0 %v472
      %v644 = vpop.f32.mrf.mxu0
      %v645 = vadd.f32 %v324, %v644
      %v646 = vpop.f32.mrf.mxu0
      %v647 = vadd.f32 %v328, %v646
      %v648 = vpop.f32.mrf.mxu0
      %v649 = vadd.f32 %v324, %v648
      %v650 = vpop.f32.mrf.mxu0
      %v651 = vadd.f32 %v328, %v650
      %652 = vmatprep.mubr.bf16.mxu0 0
      %653 = vmatmul.mubr.bf16.gmra.mxu0 %v475
      %v654 = vpop.f32.mrf.mxu0
      %v655 = vadd.f32 %v324, %v654
      %v656 = vpop.f32.mrf.mxu0
      %v657 = vadd.f32 %v328, %v656
      %v658 = vpop.f32.mrf.mxu0
      %v659 = vadd.f32 %v324, %v658
      %v660 = vpop.f32.mrf.mxu0
      %v661 = vadd.f32 %v328, %v660
      %662 = vmatprep.mubr.bf16.mxu0 0
      %663 = vmatmul.mubr.bf16.gmra.mxu0 %v478
      %v664 = vpop.f32.mrf.mxu0
      %v665 = vadd.f32 %v324, %v664
      %v666 = vpop.f32.mrf.mxu0
      %v667 = vadd.f32 %v328, %v666
      %v668 = vpop.f32.mrf.mxu0
      %v669 = vadd.f32 %v324, %v668
      %v670 = vpop.f32.mrf.mxu0
      %v671 = vadd.f32 %v328, %v670
      %672 = vdwg.mxu0
      %v673 = vmax.f32 %v515, 0.0
      %v674 = vmax.f32 %v517, 0.0
      %v675 = vmax.f32 %v519, 0.0
      %v676 = vmax.f32 %v521, 0.0
      %v677 = vmax.f32 %v525, 0.0
      %v678 = vmax.f32 %v527, 0.0
      %v679 = vmax.f32 %v529, 0.0
      %v680 = vmax.f32 %v531, 0.0
      %v681 = vmax.f32 %v535, 0.0
      %v682 = vmax.f32 %v537, 0.0
      %v683 = vmax.f32 %v539, 0.0
      %v684 = vmax.f32 %v541, 0.0
      %v685 = vmax.f32 %v545, 0.0
      %v686 = vmax.f32 %v547, 0.0
      %v687 = vmax.f32 %v549, 0.0
      %v688 = vmax.f32 %v551, 0.0
      %v689 = vmax.f32 %v555, 0.0
      %v690 = vmax.f32 %v557, 0.0
      %v691 = vmax.f32 %v559, 0.0
      %v692 = vmax.f32 %v561, 0.0
      %v693 = vmax.f32 %v565, 0.0
      %v694 = vmax.f32 %v567, 0.0
      %v695 = vmax.f32 %v569, 0.0
      %v696 = vmax.f32 %v571, 0.0
      %v697 = vmax.f32 %v575, 0.0
      %v698 = vmax.f32 %v577, 0.0
      %v699 = vmax.f32 %v579, 0.0
      %v700 = vmax.f32 %v581, 0.0
      %v701 = vmax.f32 %v585, 0.0
      %v702 = vmax.f32 %v587, 0.0
      %v703 = vmax.f32 %v589, 0.0
      %v704 = vmax.f32 %v591, 0.0
      %v705 = vmax.f32 %v595, 0.0
      %v706 = vmax.f32 %v597, 0.0
      %v707 = vmax.f32 %v599, 0.0
      %v708 = vmax.f32 %v601, 0.0
      %v709 = vmax.f32 %v605, 0.0
      %v710 = vmax.f32 %v607, 0.0
      %v711 = vmax.f32 %v609, 0.0
      %v712 = vmax.f32 %v611, 0.0
      %v713 = vmax.f32 %v615, 0.0
      %v714 = vmax.f32 %v617, 0.0
      %v715 = vmax.f32 %v619, 0.0
      %v716 = vmax.f32 %v621, 0.0
      %v717 = vmax.f32 %v625, 0.0
      %v718 = vmax.f32 %v627, 0.0
      %v719 = vmax.f32 %v629, 0.0
      %v720 = vmax.f32 %v631, 0.0
      %v721 = vmax.f32 %v635, 0.0
      %v722 = vmax.f32 %v637, 0.0
      %v723 = vmax.f32 %v639, 0.0
      %v724 = vmax.f32 %v641, 0.0
      %v725 = vmax.f32 %v645, 0.0
      %v726 = vmax.f32 %v647, 0.0
      %v727 = vmax.f32 %v649, 0.0
      %v728 = vmax.f32 %v651, 0.0
      %v729 = vmax.f32 %v655, 0.0
      %v730 = vmax.f32 %v657, 0.0
      %v731 = vmax.f32 %v659, 0.0
      %v732 = vmax.f32 %v661, 0.0
      %v733 = vmax.f32 %v665, 0.0
      %v734 = vmax.f32 %v667, 0.0
      %v735 = vmax.f32 %v669, 0.0
      %v736 = vmax.f32 %v671, 0.0
      %v737 = vpack.c.bf16 %v675, %v673
      %v738 = vpack.c.bf16 %v676, %v674
      %v739 = vpack.c.bf16 %v679, %v677
      %v740 = vpack.c.bf16 %v680, %v678
      %v741 = vpack.c.bf16 %v683, %v681
      %v742 = vpack.c.bf16 %v684, %v682
      %v743 = vpack.c.bf16 %v687, %v685
      %v744 = vpack.c.bf16 %v688, %v686
      %v745 = vpack.c.bf16 %v691, %v689
      %v746 = vpack.c.bf16 %v692, %v690
      %v747 = vpack.c.bf16 %v695, %v693
      %v748 = vpack.c.bf16 %v696, %v694
      %v749 = vpack.c.bf16 %v699, %v697
      %v750 = vpack.c.bf16 %v700, %v698
      %v751 = vpack.c.bf16 %v703, %v701
      %v752 = vpack.c.bf16 %v704, %v702
      %v753 = vpack.c.bf16 %v707, %v705
      %v754 = vpack.c.bf16 %v708, %v706
      %v755 = vpack.c.bf16 %v711, %v709
      %v756 = vpack.c.bf16 %v712, %v710
      %v757 = vpack.c.bf16 %v715, %v713
      %v758 = vpack.c.bf16 %v716, %v714
      %v759 = vpack.c.bf16 %v719, %v717
      %v760 = vpack.c.bf16 %v720, %v718
      %v761 = vpack.c.bf16 %v723, %v721
      %v762 = vpack.c.bf16 %v724, %v722
      %v763 = vpack.c.bf16 %v727, %v725
      %v764 = vpack.c.bf16 %v728, %v726
      %v765 = vpack.c.bf16 %v731, %v729
      %v766 = vpack.c.bf16 %v732, %v730
      %v767 = vpack.c.bf16 %v735, %v733
      %v768 = vpack.c.bf16 %v736, %v734
      %v769 = vld [vmem:[%s3] sm:$0xff]
      %v770 = vld [vmem:[%s3 + $0x8] sm:$0xff]
      %v771 = vld [vmem:[%s3 + $0x10] sm:$0xff]
      %v772 = vld [vmem:[%s3 + $0x18] sm:$0xff]
      %v773 = vld [vmem:[%s3 + $0x20] sm:$0xff]
      %v774 = vld [vmem:[%s3 + $0x28] sm:$0xff]
      %v775 = vld [vmem:[%s3 + $0x30] sm:$0xff]
      %v776 = vld [vmem:[%s3 + $0x38] sm:$0xff]
      %v777 = vld [vmem:[%s3 + $0x40] sm:$0xff]
      %v778 = vld [vmem:[%s3 + $0x48] sm:$0xff]
      %v779 = vld [vmem:[%s3 + $0x50] sm:$0xff]
      %v780 = vld [vmem:[%s3 + $0x58] sm:$0xff]
      %v781 = vld [vmem:[%s3 + $0x60] sm:$0xff]
      %v782 = vld [vmem:[%s3 + $0x68] sm:$0xff]
      %v783 = vld [vmem:[%s3 + $0x70] sm:$0xff]
      %v784 = vld [vmem:[%s3 + $0x78] sm:$0xff]
      %v785 = vld [vmem:[%s3 + $0x80] sm:$0xff]
      %v786 = vld [vmem:[%s3 + $0x88] sm:$0xff]
      %v787 = vld [vmem:[%s3 + $0x90] sm:$0xff]
      %v788 = vld [vmem:[%s3 + $0x98] sm:$0xff]
      %v789 = vld [vmem:[%s3 + $0xa0] sm:$0xff]
      %v790 = vld [vmem:[%s3 + $0xa8] sm:$0xff]
      %v791 = vld [vmem:[%s3 + $0xb0] sm:$0xff]
      %v792 = vld [vmem:[%s3 + $0xb8] sm:$0xff]
      %v793 = vld [vmem:[%s3 + $0xc0] sm:$0xff]
      %v794 = vld [vmem:[%s3 + $0xc8] sm:$0xff]
      %v795 = vld [vmem:[%s3 + $0xd0] sm:$0xff]
      %v796 = vld [vmem:[%s3 + $0xd8] sm:$0xff]
      %v797 = vld [vmem:[%s3 + $0xe0] sm:$0xff]
      %v798 = vld [vmem:[%s3 + $0xe8] sm:$0xff]
      %v799 = vld [vmem:[%s3 + $0xf0] sm:$0xff]
      %v800 = vld [vmem:[%s3 + $0xf8] sm:$0xff]
      %v801 = vld [vmem:[%s3 + $0x100] sm:$0xff]
      %v802 = vld [vmem:[%s3 + $0x108] sm:$0xff]
      %v803 = vld [vmem:[%s3 + $0x110] sm:$0xff]
      %v804 = vld [vmem:[%s3 + $0x118] sm:$0xff]
      %v805 = vld [vmem:[%s3 + $0x120] sm:$0xff]
      %v806 = vld [vmem:[%s3 + $0x128] sm:$0xff]
      %v807 = vld [vmem:[%s3 + $0x130] sm:$0xff]
      %v808 = vld [vmem:[%s3 + $0x138] sm:$0xff]
      %v809 = vld [vmem:[%s3 + $0x140] sm:$0xff]
      %v810 = vld [vmem:[%s3 + $0x148] sm:$0xff]
      %v811 = vld [vmem:[%s3 + $0x150] sm:$0xff]
      %v812 = vld [vmem:[%s3 + $0x158] sm:$0xff]
      %v813 = vld [vmem:[%s3 + $0x160] sm:$0xff]
      %v814 = vld [vmem:[%s3 + $0x168] sm:$0xff]
      %v815 = vld [vmem:[%s3 + $0x170] sm:$0xff]
      %v816 = vld [vmem:[%s3 + $0x178] sm:$0xff]
      %v817 = vld [vmem:[%s3 + $0x180] sm:$0xff]
      %v818 = vld [vmem:[%s3 + $0x188] sm:$0xff]
      %v819 = vld [vmem:[%s3 + $0x190] sm:$0xff]
      %v820 = vld [vmem:[%s3 + $0x198] sm:$0xff]
      %v821 = vld [vmem:[%s3 + $0x1a0] sm:$0xff]
      %v822 = vld [vmem:[%s3 + $0x1a8] sm:$0xff]
      %v823 = vld [vmem:[%s3 + $0x1b0] sm:$0xff]
      %v824 = vld [vmem:[%s3 + $0x1b8] sm:$0xff]
      %v825 = vld [vmem:[%s3 + $0x1c0] sm:$0xff]
      %v826 = vld [vmem:[%s3 + $0x1c8] sm:$0xff]
      %v827 = vld [vmem:[%s3 + $0x1d0] sm:$0xff]
      %v828 = vld [vmem:[%s3 + $0x1d8] sm:$0xff]
      %v829 = vld [vmem:[%s3 + $0x1e0] sm:$0xff]
      %v830 = vld [vmem:[%s3 + $0x1e8] sm:$0xff]
      %v831 = vld [vmem:[%s3 + $0x1f0] sm:$0xff]
      %v832 = vld [vmem:[%s3 + $0x1f8] sm:$0xff]
      %v833 = vld [vmem:[%s4] sm:$0xf]
      %v835 = vlaneseq
      %v836 = vshrl.u32 %v835, 7
      %v837 = vsub.s32 0, %v836
      %v838 = vrot.slane %v833, %v837
      %v839 = vlaneseq
      %v840 = vshrl.u32 %v839, 7
      %v841 = vsub.s32 1, %v840
      %v842 = vrot.slane %v833, %v841
      %v843 = vlaneseq
      %v844 = vshrl.u32 %v843, 7
      %v845 = vsub.s32 2, %v844
      %v846 = vrot.slane %v833, %v845
      %v847 = vlaneseq
      %v848 = vshrl.u32 %v847, 7
      %v849 = vsub.s32 3, %v848
      %v850 = vrot.slane %v833, %v849
      %v919 = vunpack.c.l.b16 %v769
      %v920 = vunpack.c.h.b16 %v769
      %v921 = vunpack.c.l.b16 %v770
      %v922 = vunpack.c.h.b16 %v770
      %v923 = vunpack.c.l.b16 %v771
      %v924 = vunpack.c.h.b16 %v771
      %v925 = vunpack.c.l.b16 %v772
      %v926 = vunpack.c.h.b16 %v772
      %v927 = vunpack.c.l.b16 %v773
      %v928 = vunpack.c.h.b16 %v773
      %v929 = vunpack.c.l.b16 %v774
      %v930 = vunpack.c.h.b16 %v774
      %v931 = vunpack.c.l.b16 %v775
      %v932 = vunpack.c.h.b16 %v775
      %v933 = vunpack.c.l.b16 %v776
      %v934 = vunpack.c.h.b16 %v776
      %v935 = vunpack.c.l.b16 %v777
      %v936 = vunpack.c.h.b16 %v777
      %v937 = vunpack.c.l.b16 %v778
      %v938 = vunpack.c.h.b16 %v778
      %v939 = vunpack.c.l.b16 %v779
      %v940 = vunpack.c.h.b16 %v779
      %v941 = vunpack.c.l.b16 %v780
      %v942 = vunpack.c.h.b16 %v780
      %v943 = vunpack.c.l.b16 %v781
      %v944 = vunpack.c.h.b16 %v781
      %v945 = vunpack.c.l.b16 %v782
      %v946 = vunpack.c.h.b16 %v782
      %v947 = vunpack.c.l.b16 %v783
      %v948 = vunpack.c.h.b16 %v783
      %v949 = vunpack.c.l.b16 %v784
      %v950 = vunpack.c.h.b16 %v784
      %v951 = vunpack.c.l.b16 %v785
      %v952 = vunpack.c.h.b16 %v785
      %v953 = vunpack.c.l.b16 %v786
      %v954 = vunpack.c.h.b16 %v786
      %v955 = vunpack.c.l.b16 %v787
      %v956 = vunpack.c.h.b16 %v787
      %v957 = vunpack.c.l.b16 %v788
      %v958 = vunpack.c.h.b16 %v788
      %v959 = vunpack.c.l.b16 %v789
      %v960 = vunpack.c.h.b16 %v789
      %v961 = vunpack.c.l.b16 %v790
      %v962 = vunpack.c.h.b16 %v790
      %v963 = vunpack.c.l.b16 %v791
      %v964 = vunpack.c.h.b16 %v791
      %v965 = vunpack.c.l.b16 %v792
      %v966 = vunpack.c.h.b16 %v792
      %v967 = vunpack.c.l.b16 %v793
      %v968 = vunpack.c.h.b16 %v793
      %v969 = vunpack.c.l.b16 %v794
      %v970 = vunpack.c.h.b16 %v794
      %v971 = vunpack.c.l.b16 %v795
      %v972 = vunpack.c.h.b16 %v795
      %v973 = vunpack.c.l.b16 %v796
      %v974 = vunpack.c.h.b16 %v796
      %v975 = vunpack.c.l.b16 %v797
      %v976 = vunpack.c.h.b16 %v797
      %v977 = vunpack.c.l.b16 %v798
      %v978 = vunpack.c.h.b16 %v798
      %v979 = vunpack.c.l.b16 %v799
      %v980 = vunpack.c.h.b16 %v799
      %v981 = vunpack.c.l.b16 %v800
      %v982 = vunpack.c.h.b16 %v800
      %v983 = vunpack.c.l.b16 %v801
      %v984 = vunpack.c.h.b16 %v801
      %v985 = vunpack.c.l.b16 %v802
      %v986 = vunpack.c.h.b16 %v802
      %v987 = vunpack.c.l.b16 %v803
      %v988 = vunpack.c.h.b16 %v803
      %v989 = vunpack.c.l.b16 %v804
      %v990 = vunpack.c.h.b16 %v804
      %v991 = vunpack.c.l.b16 %v805
      %v992 = vunpack.c.h.b16 %v805
      %v993 = vunpack.c.l.b16 %v806
      %v994 = vunpack.c.h.b16 %v806
      %v995 = vunpack.c.l.b16 %v807
      %v996 = vunpack.c.h.b16 %v807
      %v997 = vunpack.c.l.b16 %v808
      %v998 = vunpack.c.h.b16 %v808
      %v999 = vunpack.c.l.b16 %v809
      %v1000 = vunpack.c.h.b16 %v809
      %v1001 = vunpack.c.l.b16 %v810
      %v1002 = vunpack.c.h.b16 %v810
      %v1003 = vunpack.c.l.b16 %v811
      %v1004 = vunpack.c.h.b16 %v811
      %v1005 = vunpack.c.l.b16 %v812
      %v1006 = vunpack.c.h.b16 %v812
      %v1007 = vunpack.c.l.b16 %v813
      %v1008 = vunpack.c.h.b16 %v813
      %v1009 = vunpack.c.l.b16 %v814
      %v1010 = vunpack.c.h.b16 %v814
      %v1011 = vunpack.c.l.b16 %v815
      %v1012 = vunpack.c.h.b16 %v815
      %v1013 = vunpack.c.l.b16 %v816
      %v1014 = vunpack.c.h.b16 %v816
      %v1015 = vunpack.c.l.b16 %v817
      %v1016 = vunpack.c.h.b16 %v817
      %v1017 = vunpack.c.l.b16 %v818
      %v1018 = vunpack.c.h.b16 %v818
      %v1019 = vunpack.c.l.b16 %v819
      %v1020 = vunpack.c.h.b16 %v819
      %v1021 = vunpack.c.l.b16 %v820
      %v1022 = vunpack.c.h.b16 %v820
      %v1023 = vunpack.c.l.b16 %v821
      %v1024 = vunpack.c.h.b16 %v821
      %v1025 = vunpack.c.l.b16 %v822
      %v1026 = vunpack.c.h.b16 %v822
      %v1027 = vunpack.c.l.b16 %v823
      %v1028 = vunpack.c.h.b16 %v823
      %v1029 = vunpack.c.l.b16 %v824
      %v1030 = vunpack.c.h.b16 %v824
      %v1031 = vunpack.c.l.b16 %v825
      %v1032 = vunpack.c.h.b16 %v825
      %v1033 = vunpack.c.l.b16 %v826
      %v1034 = vunpack.c.h.b16 %v826
      %v1035 = vunpack.c.l.b16 %v827
      %v1036 = vunpack.c.h.b16 %v827
      %v1037 = vunpack.c.l.b16 %v828
      %v1038 = vunpack.c.h.b16 %v828
      %v1039 = vunpack.c.l.b16 %v829
      %v1040 = vunpack.c.h.b16 %v829
      %v1041 = vunpack.c.l.b16 %v830
      %v1042 = vunpack.c.h.b16 %v830
      %v1043 = vunpack.c.l.b16 %v831
      %v1044 = vunpack.c.h.b16 %v831
      %v1045 = vunpack.c.l.b16 %v832
      %v1046 = vunpack.c.h.b16 %v832
      %v1047 = vpack.c.b16 %v923, %v919
      %v1048 = vpack.c.b16 %v924, %v920
      %v1049 = vpack.c.b16 %v925, %v921
      %v1050 = vpack.c.b16 %v926, %v922
      %v1051 = vpack.c.b16 %v931, %v927
      %v1052 = vpack.c.b16 %v932, %v928
      %v1053 = vpack.c.b16 %v933, %v929
      %v1054 = vpack.c.b16 %v934, %v930
      %v1055 = vpack.c.b16 %v939, %v935
      %v1056 = vpack.c.b16 %v940, %v936
      %v1057 = vpack.c.b16 %v941, %v937
      %v1058 = vpack.c.b16 %v942, %v938
      %v1059 = vpack.c.b16 %v947, %v943
      %v1060 = vpack.c.b16 %v948, %v944
      %v1061 = vpack.c.b16 %v949, %v945
      %v1062 = vpack.c.b16 %v950, %v946
      %v1063 = vpack.c.b16 %v955, %v951
      %v1064 = vpack.c.b16 %v956, %v952
      %v1065 = vpack.c.b16 %v957, %v953
      %v1066 = vpack.c.b16 %v958, %v954
      %v1067 = vpack.c.b16 %v963, %v959
      %v1068 = vpack.c.b16 %v964, %v960
      %v1069 = vpack.c.b16 %v965, %v961
      %v1070 = vpack.c.b16 %v966, %v962
      %v1071 = vpack.c.b16 %v971, %v967
      %v1072 = vpack.c.b16 %v972, %v968
      %v1073 = vpack.c.b16 %v973, %v969
      %v1074 = vpack.c.b16 %v974, %v970
      %v1075 = vpack.c.b16 %v979, %v975
      %v1076 = vpack.c.b16 %v980, %v976
      %v1077 = vpack.c.b16 %v981, %v977
      %v1078 = vpack.c.b16 %v982, %v978
      %v1079 = vpack.c.b16 %v987, %v983
      %v1080 = vpack.c.b16 %v988, %v984
      %v1081 = vpack.c.b16 %v989, %v985
      %v1082 = vpack.c.b16 %v990, %v986
      %v1083 = vpack.c.b16 %v995, %v991
      %v1084 = vpack.c.b16 %v996, %v992
      %v1085 = vpack.c.b16 %v997, %v993
      %v1086 = vpack.c.b16 %v998, %v994
      %v1087 = vpack.c.b16 %v1003, %v999
      %v1088 = vpack.c.b16 %v1004, %v1000
      %v1089 = vpack.c.b16 %v1005, %v1001
      %v1090 = vpack.c.b16 %v1006, %v1002
      %v1091 = vpack.c.b16 %v1011, %v1007
      %v1092 = vpack.c.b16 %v1012, %v1008
      %v1093 = vpack.c.b16 %v1013, %v1009
      %v1094 = vpack.c.b16 %v1014, %v1010
      %v1095 = vpack.c.b16 %v1019, %v1015
      %v1096 = vpack.c.b16 %v1020, %v1016
      %v1097 = vpack.c.b16 %v1021, %v1017
      %v1098 = vpack.c.b16 %v1022, %v1018
      %v1099 = vpack.c.b16 %v1027, %v1023
      %v1100 = vpack.c.b16 %v1028, %v1024
      %v1101 = vpack.c.b16 %v1029, %v1025
      %v1102 = vpack.c.b16 %v1030, %v1026
      %v1103 = vpack.c.b16 %v1035, %v1031
      %v1104 = vpack.c.b16 %v1036, %v1032
      %v1105 = vpack.c.b16 %v1037, %v1033
      %v1106 = vpack.c.b16 %v1038, %v1034
      %v1107 = vpack.c.b16 %v1043, %v1039
      %v1108 = vpack.c.b16 %v1044, %v1040
      %v1109 = vpack.c.b16 %v1045, %v1041
      %v1110 = vpack.c.b16 %v1046, %v1042
      %1175 = vmatprep.subr.bf16.mxu0 %v1076
      %1176 = vmatpush1.bf16.msra.mxu0 %v1075
      %1177 = vmatprep.subr.bf16.mxu0 %v1072
      %1178 = vmatpush1.bf16.msra.mxu0 %v1071
      %1179 = vmatprep.subr.bf16.mxu0 %v1068
      %1180 = vmatpush1.bf16.msra.mxu0 %v1067
      %1181 = vmatprep.subr.bf16.mxu0 %v1064
      %1182 = vmatpush1.bf16.msra.mxu0 %v1063
      %1183 = vmatprep.subr.bf16.mxu0 %v1060
      %1184 = vmatpush1.bf16.msra.mxu0 %v1059
      %1185 = vmatprep.subr.bf16.mxu0 %v1056
      %1186 = vmatpush1.bf16.msra.mxu0 %v1055
      %1187 = vmatprep.subr.bf16.mxu0 %v1052
      %1188 = vmatpush1.bf16.msra.mxu0 %v1051
      %1189 = vmatprep.subr.bf16.mxu0 %v1048
      %1190 = vmatpush1.bf16.msra.mxu0 %v1047
      %1191 = vmatprep.subr.bf16.mxu0 %v1108
      %1192 = vmatpush2.bf16.msra.mxu0 %v1107
      %1193 = vmatprep.subr.bf16.mxu0 %v1104
      %1194 = vmatpush2.bf16.msra.mxu0 %v1103
      %1195 = vmatprep.subr.bf16.mxu0 %v1100
      %1196 = vmatpush2.bf16.msra.mxu0 %v1099
      %1197 = vmatprep.subr.bf16.mxu0 %v1096
      %1198 = vmatpush2.bf16.msra.mxu0 %v1095
      %1199 = vmatprep.subr.bf16.mxu0 %v1092
      %1200 = vmatpush2.bf16.msra.mxu0 %v1091
      %1201 = vmatprep.subr.bf16.mxu0 %v1088
      %1202 = vmatpush2.bf16.msra.mxu0 %v1087
      %1203 = vmatprep.subr.bf16.mxu0 %v1084
      %1204 = vmatpush2.bf16.msra.mxu0 %v1083
      %1205 = vmatprep.subr.bf16.mxu0 %v1080
      %1206 = vmatpush2.bf16.msra.mxu0 %v1079
      %1207 = vmatprep.mubr.bf16.mxu0 %v738
      %1208 = vmatmul.mubr.bf16.gmra.mxu0 %v737
      %v1209 = vpop.f32.mrf.mxu0
      %v1210 = vadd.f32 %v838, %v1209
      %v1211 = vpop.f32.mrf.mxu0
      %v1212 = vadd.f32 %v842, %v1211
      %v1213 = vpop.f32.mrf.mxu0
      %v1214 = vadd.f32 %v838, %v1213
      %v1215 = vpop.f32.mrf.mxu0
      %v1216 = vadd.f32 %v842, %v1215
      %1217 = vmatprep.mubr.bf16.mxu0 %v740
      %1218 = vmatmul.mubr.bf16.gmra.mxu0 %v739
      %v1219 = vpop.f32.mrf.mxu0
      %v1220 = vadd.f32 %v838, %v1219
      %v1221 = vpop.f32.mrf.mxu0
      %v1222 = vadd.f32 %v842, %v1221
      %v1223 = vpop.f32.mrf.mxu0
      %v1224 = vadd.f32 %v838, %v1223
      %v1225 = vpop.f32.mrf.mxu0
      %v1226 = vadd.f32 %v842, %v1225
      %1227 = vmatprep.mubr.bf16.mxu0 %v742
      %1228 = vmatmul.mubr.bf16.gmra.mxu0 %v741
      %v1229 = vpop.f32.mrf.mxu0
      %v1230 = vadd.f32 %v838, %v1229
      %v1231 = vpop.f32.mrf.mxu0
      %v1232 = vadd.f32 %v842, %v1231
      %v1233 = vpop.f32.mrf.mxu0
      %v1234 = vadd.f32 %v838, %v1233
      %v1235 = vpop.f32.mrf.mxu0
      %v1236 = vadd.f32 %v842, %v1235
      %1237 = vmatprep.mubr.bf16.mxu0 %v744
      %1238 = vmatmul.mubr.bf16.gmra.mxu0 %v743
      %v1239 = vpop.f32.mrf.mxu0
      %v1240 = vadd.f32 %v838, %v1239
      %v1241 = vpop.f32.mrf.mxu0
      %v1242 = vadd.f32 %v842, %v1241
      %v1243 = vpop.f32.mrf.mxu0
      %v1244 = vadd.f32 %v838, %v1243
      %v1245 = vpop.f32.mrf.mxu0
      %v1246 = vadd.f32 %v842, %v1245
      %1247 = vmatprep.mubr.bf16.mxu0 %v746
      %1248 = vmatmul.mubr.bf16.gmra.mxu0 %v745
      %v1249 = vpop.f32.mrf.mxu0
      %v1250 = vadd.f32 %v838, %v1249
      %v1251 = vpop.f32.mrf.mxu0
      %v1252 = vadd.f32 %v842, %v1251
      %v1253 = vpop.f32.mrf.mxu0
      %v1254 = vadd.f32 %v838, %v1253
      %v1255 = vpop.f32.mrf.mxu0
      %v1256 = vadd.f32 %v842, %v1255
      %1257 = vmatprep.mubr.bf16.mxu0 %v748
      %1258 = vmatmul.mubr.bf16.gmra.mxu0 %v747
      %v1259 = vpop.f32.mrf.mxu0
      %v1260 = vadd.f32 %v838, %v1259
      %v1261 = vpop.f32.mrf.mxu0
      %v1262 = vadd.f32 %v842, %v1261
      %v1263 = vpop.f32.mrf.mxu0
      %v1264 = vadd.f32 %v838, %v1263
      %v1265 = vpop.f32.mrf.mxu0
      %v1266 = vadd.f32 %v842, %v1265
      %1267 = vmatprep.mubr.bf16.mxu0 %v750
      %1268 = vmatmul.mubr.bf16.gmra.mxu0 %v749
      %v1269 = vpop.f32.mrf.mxu0
      %v1270 = vadd.f32 %v838, %v1269
      %v1271 = vpop.f32.mrf.mxu0
      %v1272 = vadd.f32 %v842, %v1271
      %v1273 = vpop.f32.mrf.mxu0
      %v1274 = vadd.f32 %v838, %v1273
      %v1275 = vpop.f32.mrf.mxu0
      %v1276 = vadd.f32 %v842, %v1275
      %1277 = vmatprep.mubr.bf16.mxu0 %v752
      %1278 = vmatmul.mubr.bf16.gmra.mxu0 %v751
      %v1279 = vpop.f32.mrf.mxu0
      %v1280 = vadd.f32 %v838, %v1279
      %v1281 = vpop.f32.mrf.mxu0
      %v1282 = vadd.f32 %v842, %v1281
      %v1283 = vpop.f32.mrf.mxu0
      %v1284 = vadd.f32 %v838, %v1283
      %v1285 = vpop.f32.mrf.mxu0
      %v1286 = vadd.f32 %v842, %v1285
      %1287 = vmatprep.mubr.bf16.mxu0 %v754
      %1288 = vmatmul.mubr.bf16.gmra.mxu0 %v753
      %v1289 = vpop.f32.mrf.mxu0
      %v1290 = vadd.f32 %v838, %v1289
      %v1291 = vpop.f32.mrf.mxu0
      %v1292 = vadd.f32 %v842, %v1291
      %v1293 = vpop.f32.mrf.mxu0
      %v1294 = vadd.f32 %v838, %v1293
      %v1295 = vpop.f32.mrf.mxu0
      %v1296 = vadd.f32 %v842, %v1295
      %1297 = vmatprep.mubr.bf16.mxu0 %v756
      %1298 = vmatmul.mubr.bf16.gmra.mxu0 %v755
      %v1299 = vpop.f32.mrf.mxu0
      %v1300 = vadd.f32 %v838, %v1299
      %v1301 = vpop.f32.mrf.mxu0
      %v1302 = vadd.f32 %v842, %v1301
      %v1303 = vpop.f32.mrf.mxu0
      %v1304 = vadd.f32 %v838, %v1303
      %v1305 = vpop.f32.mrf.mxu0
      %v1306 = vadd.f32 %v842, %v1305
      %1307 = vmatprep.mubr.bf16.mxu0 %v758
      %1308 = vmatmul.mubr.bf16.gmra.mxu0 %v757
      %v1309 = vpop.f32.mrf.mxu0
      %v1310 = vadd.f32 %v838, %v1309
      %v1311 = vpop.f32.mrf.mxu0
      %v1312 = vadd.f32 %v842, %v1311
      %v1313 = vpop.f32.mrf.mxu0
      %v1314 = vadd.f32 %v838, %v1313
      %v1315 = vpop.f32.mrf.mxu0
      %v1316 = vadd.f32 %v842, %v1315
      %1317 = vmatprep.mubr.bf16.mxu0 %v760
      %1318 = vmatmul.mubr.bf16.gmra.mxu0 %v759
      %v1319 = vpop.f32.mrf.mxu0
      %v1320 = vadd.f32 %v838, %v1319
      %v1321 = vpop.f32.mrf.mxu0
      %v1322 = vadd.f32 %v842, %v1321
      %v1323 = vpop.f32.mrf.mxu0
      %v1324 = vadd.f32 %v838, %v1323
      %v1325 = vpop.f32.mrf.mxu0
      %v1326 = vadd.f32 %v842, %v1325
      %1327 = vmatprep.mubr.bf16.mxu0 %v762
      %1328 = vmatmul.mubr.bf16.gmra.mxu0 %v761
      %v1329 = vpop.f32.mrf.mxu0
      %v1330 = vadd.f32 %v838, %v1329
      %v1331 = vpop.f32.mrf.mxu0
      %v1332 = vadd.f32 %v842, %v1331
      %v1333 = vpop.f32.mrf.mxu0
      %v1334 = vadd.f32 %v838, %v1333
      %v1335 = vpop.f32.mrf.mxu0
      %v1336 = vadd.f32 %v842, %v1335
      %1337 = vmatprep.mubr.bf16.mxu0 %v764
      %1338 = vmatmul.mubr.bf16.gmra.mxu0 %v763
      %v1339 = vpop.f32.mrf.mxu0
      %v1340 = vadd.f32 %v838, %v1339
      %v1341 = vpop.f32.mrf.mxu0
      %v1342 = vadd.f32 %v842, %v1341
      %v1343 = vpop.f32.mrf.mxu0
      %v1344 = vadd.f32 %v838, %v1343
      %v1345 = vpop.f32.mrf.mxu0
      %v1346 = vadd.f32 %v842, %v1345
      %1347 = vmatprep.mubr.bf16.mxu0 %v766
      %1348 = vmatmul.mubr.bf16.gmra.mxu0 %v765
      %v1349 = vpop.f32.mrf.mxu0
      %v1350 = vadd.f32 %v838, %v1349
      %v1351 = vpop.f32.mrf.mxu0
      %v1352 = vadd.f32 %v842, %v1351
      %v1353 = vpop.f32.mrf.mxu0
      %v1354 = vadd.f32 %v838, %v1353
      %v1355 = vpop.f32.mrf.mxu0
      %v1356 = vadd.f32 %v842, %v1355
      %1357 = vmatprep.mubr.bf16.mxu0 %v768
      %1358 = vmatmul.mubr.bf16.gmra.mxu0 %v767
      %v1359 = vpop.f32.mrf.mxu0
      %v1360 = vadd.f32 %v838, %v1359
      %v1361 = vpop.f32.mrf.mxu0
      %v1362 = vadd.f32 %v842, %v1361
      %v1363 = vpop.f32.mrf.mxu0
      %v1364 = vadd.f32 %v838, %v1363
      %v1365 = vpop.f32.mrf.mxu0
      %v1366 = vadd.f32 %v842, %v1365
      %1367 = vdwg.mxu0
      %1368 = vmatprep.subr.bf16.mxu0 %v1078
      %1369 = vmatpush1.bf16.msra.mxu0 %v1077
      %1370 = vmatprep.subr.bf16.mxu0 %v1074
      %1371 = vmatpush1.bf16.msra.mxu0 %v1073
      %1372 = vmatprep.subr.bf16.mxu0 %v1070
      %1373 = vmatpush1.bf16.msra.mxu0 %v1069
      %1374 = vmatprep.subr.bf16.mxu0 %v1066
      %1375 = vmatpush1.bf16.msra.mxu0 %v1065
      %1376 = vmatprep.subr.bf16.mxu0 %v1062
      %1377 = vmatpush1.bf16.msra.mxu0 %v1061
      %1378 = vmatprep.subr.bf16.mxu0 %v1058
      %1379 = vmatpush1.bf16.msra.mxu0 %v1057
      %1380 = vmatprep.subr.bf16.mxu0 %v1054
      %1381 = vmatpush1.bf16.msra.mxu0 %v1053
      %1382 = vmatprep.subr.bf16.mxu0 %v1050
      %1383 = vmatpush1.bf16.msra.mxu0 %v1049
      %1384 = vmatprep.subr.bf16.mxu0 %v1110
      %1385 = vmatpush2.bf16.msra.mxu0 %v1109
      %1386 = vmatprep.subr.bf16.mxu0 %v1106
      %1387 = vmatpush2.bf16.msra.mxu0 %v1105
      %1388 = vmatprep.subr.bf16.mxu0 %v1102
      %1389 = vmatpush2.bf16.msra.mxu0 %v1101
      %1390 = vmatprep.subr.bf16.mxu0 %v1098
      %1391 = vmatpush2.bf16.msra.mxu0 %v1097
      %1392 = vmatprep.subr.bf16.mxu0 %v1094
      %1393 = vmatpush2.bf16.msra.mxu0 %v1093
      %1394 = vmatprep.subr.bf16.mxu0 %v1090
      %1395 = vmatpush2.bf16.msra.mxu0 %v1089
      %1396 = vmatprep.subr.bf16.mxu0 %v1086
      %1397 = vmatpush2.bf16.msra.mxu0 %v1085
      %1398 = vmatprep.subr.bf16.mxu0 %v1082
      %1399 = vmatpush2.bf16.msra.mxu0 %v1081
      %1400 = vmatprep.mubr.bf16.mxu0 %v738
      %1401 = vmatmul.mubr.bf16.gmra.mxu0 %v737
      %v1402 = vpop.f32.mrf.mxu0
      %v1403 = vadd.f32 %v846, %v1402
      %v1404 = vpop.f32.mrf.mxu0
      %v1405 = vadd.f32 %v850, %v1404
      %v1406 = vpop.f32.mrf.mxu0
      %v1407 = vadd.f32 %v846, %v1406
      %v1408 = vpop.f32.mrf.mxu0
      %v1409 = vadd.f32 %v850, %v1408
      %1410 = vmatprep.mubr.bf16.mxu0 %v740
      %1411 = vmatmul.mubr.bf16.gmra.mxu0 %v739
      %v1412 = vpop.f32.mrf.mxu0
      %v1413 = vadd.f32 %v846, %v1412
      %v1414 = vpop.f32.mrf.mxu0
      %v1415 = vadd.f32 %v850, %v1414
      %v1416 = vpop.f32.mrf.mxu0
      %v1417 = vadd.f32 %v846, %v1416
      %v1418 = vpop.f32.mrf.mxu0
      %v1419 = vadd.f32 %v850, %v1418
      %1420 = vmatprep.mubr.bf16.mxu0 %v742
      %1421 = vmatmul.mubr.bf16.gmra.mxu0 %v741
      %v1422 = vpop.f32.mrf.mxu0
      %v1423 = vadd.f32 %v846, %v1422
      %v1424 = vpop.f32.mrf.mxu0
      %v1425 = vadd.f32 %v850, %v1424
      %v1426 = vpop.f32.mrf.mxu0
      %v1427 = vadd.f32 %v846, %v1426
      %v1428 = vpop.f32.mrf.mxu0
      %v1429 = vadd.f32 %v850, %v1428
      %1430 = vmatprep.mubr.bf16.mxu0 %v744
      %1431 = vmatmul.mubr.bf16.gmra.mxu0 %v743
      %v1432 = vpop.f32.mrf.mxu0
      %v1433 = vadd.f32 %v846, %v1432
      %v1434 = vpop.f32.mrf.mxu0
      %v1435 = vadd.f32 %v850, %v1434
      %v1436 = vpop.f32.mrf.mxu0
      %v1437 = vadd.f32 %v846, %v1436
      %v1438 = vpop.f32.mrf.mxu0
      %v1439 = vadd.f32 %v850, %v1438
      %1440 = vmatprep.mubr.bf16.mxu0 %v746
      %1441 = vmatmul.mubr.bf16.gmra.mxu0 %v745
      %v1442 = vpop.f32.mrf.mxu0
      %v1443 = vadd.f32 %v846, %v1442
      %v1444 = vpop.f32.mrf.mxu0
      %v1445 = vadd.f32 %v850, %v1444
      %v1446 = vpop.f32.mrf.mxu0
      %v1447 = vadd.f32 %v846, %v1446
      %v1448 = vpop.f32.mrf.mxu0
      %v1449 = vadd.f32 %v850, %v1448
      %1450 = vmatprep.mubr.bf16.mxu0 %v748
      %1451 = vmatmul.mubr.bf16.gmra.mxu0 %v747
      %v1452 = vpop.f32.mrf.mxu0
      %v1453 = vadd.f32 %v846, %v1452
      %v1454 = vpop.f32.mrf.mxu0
      %v1455 = vadd.f32 %v850, %v1454
      %v1456 = vpop.f32.mrf.mxu0
      %v1457 = vadd.f32 %v846, %v1456
      %v1458 = vpop.f32.mrf.mxu0
      %v1459 = vadd.f32 %v850, %v1458
      %1460 = vmatprep.mubr.bf16.mxu0 %v750
      %1461 = vmatmul.mubr.bf16.gmra.mxu0 %v749
      %v1462 = vpop.f32.mrf.mxu0
      %v1463 = vadd.f32 %v846, %v1462
      %v1464 = vpop.f32.mrf.mxu0
      %v1465 = vadd.f32 %v850, %v1464
      %v1466 = vpop.f32.mrf.mxu0
      %v1467 = vadd.f32 %v846, %v1466
      %v1468 = vpop.f32.mrf.mxu0
      %v1469 = vadd.f32 %v850, %v1468
      %1470 = vmatprep.mubr.bf16.mxu0 %v752
      %1471 = vmatmul.mubr.bf16.gmra.mxu0 %v751
      %v1472 = vpop.f32.mrf.mxu0
      %v1473 = vadd.f32 %v846, %v1472
      %v1474 = vpop.f32.mrf.mxu0
      %v1475 = vadd.f32 %v850, %v1474
      %v1476 = vpop.f32.mrf.mxu0
      %v1477 = vadd.f32 %v846, %v1476
      %v1478 = vpop.f32.mrf.mxu0
      %v1479 = vadd.f32 %v850, %v1478
      %1480 = vmatprep.mubr.bf16.mxu0 %v754
      %1481 = vmatmul.mubr.bf16.gmra.mxu0 %v753
      %v1482 = vpop.f32.mrf.mxu0
      %v1483 = vadd.f32 %v846, %v1482
      %v1484 = vpop.f32.mrf.mxu0
      %v1485 = vadd.f32 %v850, %v1484
      %v1486 = vpop.f32.mrf.mxu0
      %v1487 = vadd.f32 %v846, %v1486
      %v1488 = vpop.f32.mrf.mxu0
      %v1489 = vadd.f32 %v850, %v1488
      %1490 = vmatprep.mubr.bf16.mxu0 %v756
      %1491 = vmatmul.mubr.bf16.gmra.mxu0 %v755
      %v1492 = vpop.f32.mrf.mxu0
      %v1493 = vadd.f32 %v846, %v1492
      %v1494 = vpop.f32.mrf.mxu0
      %v1495 = vadd.f32 %v850, %v1494
      %v1496 = vpop.f32.mrf.mxu0
      %v1497 = vadd.f32 %v846, %v1496
      %v1498 = vpop.f32.mrf.mxu0
      %v1499 = vadd.f32 %v850, %v1498
      %1500 = vmatprep.mubr.bf16.mxu0 %v758
      %1501 = vmatmul.mubr.bf16.gmra.mxu0 %v757
      %v1502 = vpop.f32.mrf.mxu0
      %v1503 = vadd.f32 %v846, %v1502
      %v1504 = vpop.f32.mrf.mxu0
      %v1505 = vadd.f32 %v850, %v1504
      %v1506 = vpop.f32.mrf.mxu0
      %v1507 = vadd.f32 %v846, %v1506
      %v1508 = vpop.f32.mrf.mxu0
      %v1509 = vadd.f32 %v850, %v1508
      %1510 = vmatprep.mubr.bf16.mxu0 %v760
      %1511 = vmatmul.mubr.bf16.gmra.mxu0 %v759
      %v1512 = vpop.f32.mrf.mxu0
      %v1513 = vadd.f32 %v846, %v1512
      %v1514 = vpop.f32.mrf.mxu0
      %v1515 = vadd.f32 %v850, %v1514
      %v1516 = vpop.f32.mrf.mxu0
      %v1517 = vadd.f32 %v846, %v1516
      %v1518 = vpop.f32.mrf.mxu0
      %v1519 = vadd.f32 %v850, %v1518
      %1520 = vmatprep.mubr.bf16.mxu0 %v762
      %1521 = vmatmul.mubr.bf16.gmra.mxu0 %v761
      %v1522 = vpop.f32.mrf.mxu0
      %v1523 = vadd.f32 %v846, %v1522
      %v1524 = vpop.f32.mrf.mxu0
      %v1525 = vadd.f32 %v850, %v1524
      %v1526 = vpop.f32.mrf.mxu0
      %v1527 = vadd.f32 %v846, %v1526
      %v1528 = vpop.f32.mrf.mxu0
      %v1529 = vadd.f32 %v850, %v1528
      %1530 = vmatprep.mubr.bf16.mxu0 %v764
      %1531 = vmatmul.mubr.bf16.gmra.mxu0 %v763
      %v1532 = vpop.f32.mrf.mxu0
      %v1533 = vadd.f32 %v846, %v1532
      %v1534 = vpop.f32.mrf.mxu0
      %v1535 = vadd.f32 %v850, %v1534
      %v1536 = vpop.f32.mrf.mxu0
      %v1537 = vadd.f32 %v846, %v1536
      %v1538 = vpop.f32.mrf.mxu0
      %v1539 = vadd.f32 %v850, %v1538
      %1540 = vmatprep.mubr.bf16.mxu0 %v766
      %1541 = vmatmul.mubr.bf16.gmra.mxu0 %v765
      %v1542 = vpop.f32.mrf.mxu0
      %v1543 = vadd.f32 %v846, %v1542
      %v1544 = vpop.f32.mrf.mxu0
      %v1545 = vadd.f32 %v850, %v1544
      %v1546 = vpop.f32.mrf.mxu0
      %v1547 = vadd.f32 %v846, %v1546
      %v1548 = vpop.f32.mrf.mxu0
      %v1549 = vadd.f32 %v850, %v1548
      %1550 = vmatprep.mubr.bf16.mxu0 %v768
      %1551 = vmatmul.mubr.bf16.gmra.mxu0 %v767
      %v1552 = vpop.f32.mrf.mxu0
      %v1553 = vadd.f32 %v846, %v1552
      %v1554 = vpop.f32.mrf.mxu0
      %v1555 = vadd.f32 %v850, %v1554
      %v1556 = vpop.f32.mrf.mxu0
      %v1557 = vadd.f32 %v846, %v1556
      %v1558 = vpop.f32.mrf.mxu0
      %v1559 = vadd.f32 %v850, %v1558
      %1560 = vdwg.mxu0
      %v1561 = vmax.f32 %v1210, 0.0
      %v1562 = vmax.f32 %v1212, 0.0
      %v1563 = vmax.f32 %v1403, 0.0
      %v1564 = vmax.f32 %v1405, 0.0
      %v1565 = vmax.f32 %v1214, 0.0
      %v1566 = vmax.f32 %v1216, 0.0
      %v1567 = vmax.f32 %v1407, 0.0
      %v1568 = vmax.f32 %v1409, 0.0
      %v1569 = vmax.f32 %v1220, 0.0
      %v1570 = vmax.f32 %v1222, 0.0
      %v1571 = vmax.f32 %v1413, 0.0
      %v1572 = vmax.f32 %v1415, 0.0
      %v1573 = vmax.f32 %v1224, 0.0
      %v1574 = vmax.f32 %v1226, 0.0
      %v1575 = vmax.f32 %v1417, 0.0
      %v1576 = vmax.f32 %v1419, 0.0
      %v1577 = vmax.f32 %v1230, 0.0
      %v1578 = vmax.f32 %v1232, 0.0
      %v1579 = vmax.f32 %v1423, 0.0
      %v1580 = vmax.f32 %v1425, 0.0
      %v1581 = vmax.f32 %v1234, 0.0
      %v1582 = vmax.f32 %v1236, 0.0
      %v1583 = vmax.f32 %v1427, 0.0
      %v1584 = vmax.f32 %v1429, 0.0
      %v1585 = vmax.f32 %v1240, 0.0
      %v1586 = vmax.f32 %v1242, 0.0
      %v1587 = vmax.f32 %v1433, 0.0
      %v1588 = vmax.f32 %v1435, 0.0
      %v1589 = vmax.f32 %v1244, 0.0
      %v1590 = vmax.f32 %v1246, 0.0
      %v1591 = vmax.f32 %v1437, 0.0
      %v1592 = vmax.f32 %v1439, 0.0
      %v1593 = vmax.f32 %v1250, 0.0
      %v1594 = vmax.f32 %v1252, 0.0
      %v1595 = vmax.f32 %v1443, 0.0
      %v1596 = vmax.f32 %v1445, 0.0
      %v1597 = vmax.f32 %v1254, 0.0
      %v1598 = vmax.f32 %v1256, 0.0
      %v1599 = vmax.f32 %v1447, 0.0
      %v1600 = vmax.f32 %v1449, 0.0
      %v1601 = vmax.f32 %v1260, 0.0
      %v1602 = vmax.f32 %v1262, 0.0
      %v1603 = vmax.f32 %v1453, 0.0
      %v1604 = vmax.f32 %v1455, 0.0
      %v1605 = vmax.f32 %v1264, 0.0
      %v1606 = vmax.f32 %v1266, 0.0
      %v1607 = vmax.f32 %v1457, 0.0
      %v1608 = vmax.f32 %v1459, 0.0
      %v1609 = vmax.f32 %v1270, 0.0
      %v1610 = vmax.f32 %v1272, 0.0
      %v1611 = vmax.f32 %v1463, 0.0
      %v1612 = vmax.f32 %v1465, 0.0
      %v1613 = vmax.f32 %v1274, 0.0
      %v1614 = vmax.f32 %v1276, 0.0
      %v1615 = vmax.f32 %v1467, 0.0
      %v1616 = vmax.f32 %v1469, 0.0
      %v1617 = vmax.f32 %v1280, 0.0
      %v1618 = vmax.f32 %v1282, 0.0
      %v1619 = vmax.f32 %v1473, 0.0
      %v1620 = vmax.f32 %v1475, 0.0
      %v1621 = vmax.f32 %v1284, 0.0
      %v1622 = vmax.f32 %v1286, 0.0
      %v1623 = vmax.f32 %v1477, 0.0
      %v1624 = vmax.f32 %v1479, 0.0
      %v1625 = vmax.f32 %v1290, 0.0
      %v1626 = vmax.f32 %v1292, 0.0
      %v1627 = vmax.f32 %v1483, 0.0
      %v1628 = vmax.f32 %v1485, 0.0
      %v1629 = vmax.f32 %v1294, 0.0
      %v1630 = vmax.f32 %v1296, 0.0
      %v1631 = vmax.f32 %v1487, 0.0
      %v1632 = vmax.f32 %v1489, 0.0
      %v1633 = vmax.f32 %v1300, 0.0
      %v1634 = vmax.f32 %v1302, 0.0
      %v1635 = vmax.f32 %v1493, 0.0
      %v1636 = vmax.f32 %v1495, 0.0
      %v1637 = vmax.f32 %v1304, 0.0
      %v1638 = vmax.f32 %v1306, 0.0
      %v1639 = vmax.f32 %v1497, 0.0
      %v1640 = vmax.f32 %v1499, 0.0
      %v1641 = vmax.f32 %v1310, 0.0
      %v1642 = vmax.f32 %v1312, 0.0
      %v1643 = vmax.f32 %v1503, 0.0
      %v1644 = vmax.f32 %v1505, 0.0
      %v1645 = vmax.f32 %v1314, 0.0
      %v1646 = vmax.f32 %v1316, 0.0
      %v1647 = vmax.f32 %v1507, 0.0
      %v1648 = vmax.f32 %v1509, 0.0
      %v1649 = vmax.f32 %v1320, 0.0
      %v1650 = vmax.f32 %v1322, 0.0
      %v1651 = vmax.f32 %v1513, 0.0
      %v1652 = vmax.f32 %v1515, 0.0
      %v1653 = vmax.f32 %v1324, 0.0
      %v1654 = vmax.f32 %v1326, 0.0
      %v1655 = vmax.f32 %v1517, 0.0
      %v1656 = vmax.f32 %v1519, 0.0
      %v1657 = vmax.f32 %v1330, 0.0
      %v1658 = vmax.f32 %v1332, 0.0
      %v1659 = vmax.f32 %v1523, 0.0
      %v1660 = vmax.f32 %v1525, 0.0
      %v1661 = vmax.f32 %v1334, 0.0
      %v1662 = vmax.f32 %v1336, 0.0
      %v1663 = vmax.f32 %v1527, 0.0
      %v1664 = vmax.f32 %v1529, 0.0
      %v1665 = vmax.f32 %v1340, 0.0
      %v1666 = vmax.f32 %v1342, 0.0
      %v1667 = vmax.f32 %v1533, 0.0
      %v1668 = vmax.f32 %v1535, 0.0
      %v1669 = vmax.f32 %v1344, 0.0
      %v1670 = vmax.f32 %v1346, 0.0
      %v1671 = vmax.f32 %v1537, 0.0
      %v1672 = vmax.f32 %v1539, 0.0
      %v1673 = vmax.f32 %v1350, 0.0
      %v1674 = vmax.f32 %v1352, 0.0
      %v1675 = vmax.f32 %v1543, 0.0
      %v1676 = vmax.f32 %v1545, 0.0
      %v1677 = vmax.f32 %v1354, 0.0
      %v1678 = vmax.f32 %v1356, 0.0
      %v1679 = vmax.f32 %v1547, 0.0
      %v1680 = vmax.f32 %v1549, 0.0
      %v1681 = vmax.f32 %v1360, 0.0
      %v1682 = vmax.f32 %v1362, 0.0
      %v1683 = vmax.f32 %v1553, 0.0
      %v1684 = vmax.f32 %v1555, 0.0
      %v1685 = vmax.f32 %v1364, 0.0
      %v1686 = vmax.f32 %v1366, 0.0
      %v1687 = vmax.f32 %v1557, 0.0
      %v1688 = vmax.f32 %v1559, 0.0
      %v1689 = vpack.c.bf16 %v1565, %v1561
      %v1690 = vpack.c.bf16 %v1566, %v1562
      %v1691 = vpack.c.bf16 %v1567, %v1563
      %v1692 = vpack.c.bf16 %v1568, %v1564
      %v1693 = vpack.c.bf16 %v1573, %v1569
      %v1694 = vpack.c.bf16 %v1574, %v1570
      %v1695 = vpack.c.bf16 %v1575, %v1571
      %v1696 = vpack.c.bf16 %v1576, %v1572
      %v1697 = vpack.c.bf16 %v1581, %v1577
      %v1698 = vpack.c.bf16 %v1582, %v1578
      %v1699 = vpack.c.bf16 %v1583, %v1579
      %v1700 = vpack.c.bf16 %v1584, %v1580
      %v1701 = vpack.c.bf16 %v1589, %v1585
      %v1702 = vpack.c.bf16 %v1590, %v1586
      %v1703 = vpack.c.bf16 %v1591, %v1587
      %v1704 = vpack.c.bf16 %v1592, %v1588
      %v1705 = vpack.c.bf16 %v1597, %v1593
      %v1706 = vpack.c.bf16 %v1598, %v1594
      %v1707 = vpack.c.bf16 %v1599, %v1595
      %v1708 = vpack.c.bf16 %v1600, %v1596
      %v1709 = vpack.c.bf16 %v1605, %v1601
      %v1710 = vpack.c.bf16 %v1606, %v1602
      %v1711 = vpack.c.bf16 %v1607, %v1603
      %v1712 = vpack.c.bf16 %v1608, %v1604
      %v1713 = vpack.c.bf16 %v1613, %v1609
      %v1714 = vpack.c.bf16 %v1614, %v1610
      %v1715 = vpack.c.bf16 %v1615, %v1611
      %v1716 = vpack.c.bf16 %v1616, %v1612
      %v1717 = vpack.c.bf16 %v1621, %v1617
      %v1718 = vpack.c.bf16 %v1622, %v1618
      %v1719 = vpack.c.bf16 %v1623, %v1619
      %v1720 = vpack.c.bf16 %v1624, %v1620
      %v1721 = vpack.c.bf16 %v1629, %v1625
      %v1722 = vpack.c.bf16 %v1630, %v1626
      %v1723 = vpack.c.bf16 %v1631, %v1627
      %v1724 = vpack.c.bf16 %v1632, %v1628
      %v1725 = vpack.c.bf16 %v1637, %v1633
      %v1726 = vpack.c.bf16 %v1638, %v1634
      %v1727 = vpack.c.bf16 %v1639, %v1635
      %v1728 = vpack.c.bf16 %v1640, %v1636
      %v1729 = vpack.c.bf16 %v1645, %v1641
      %v1730 = vpack.c.bf16 %v1646, %v1642
      %v1731 = vpack.c.bf16 %v1647, %v1643
      %v1732 = vpack.c.bf16 %v1648, %v1644
      %v1733 = vpack.c.bf16 %v1653, %v1649
      %v1734 = vpack.c.bf16 %v1654, %v1650
      %v1735 = vpack.c.bf16 %v1655, %v1651
      %v1736 = vpack.c.bf16 %v1656, %v1652
      %v1737 = vpack.c.bf16 %v1661, %v1657
      %v1738 = vpack.c.bf16 %v1662, %v1658
      %v1739 = vpack.c.bf16 %v1663, %v1659
      %v1740 = vpack.c.bf16 %v1664, %v1660
      %v1741 = vpack.c.bf16 %v1669, %v1665
      %v1742 = vpack.c.bf16 %v1670, %v1666
      %v1743 = vpack.c.bf16 %v1671, %v1667
      %v1744 = vpack.c.bf16 %v1672, %v1668
      %v1745 = vpack.c.bf16 %v1677, %v1673
      %v1746 = vpack.c.bf16 %v1678, %v1674
      %v1747 = vpack.c.bf16 %v1679, %v1675
      %v1748 = vpack.c.bf16 %v1680, %v1676
      %v1749 = vpack.c.bf16 %v1685, %v1681
      %v1750 = vpack.c.bf16 %v1686, %v1682
      %v1751 = vpack.c.bf16 %v1687, %v1683
      %v1752 = vpack.c.bf16 %v1688, %v1684
      %v1753 = vld [vmem:[%s5] sm:$0xf]
      %v1754 = vld [vmem:[%s5 + $0x4] sm:$0xf]
      %v1755 = vld [vmem:[%s5 + $0x8] sm:$0xf]
      %v1756 = vld [vmem:[%s5 + $0xc] sm:$0xf]
      %v1757 = vld [vmem:[%s5 + $0x10] sm:$0xf]
      %v1758 = vld [vmem:[%s5 + $0x14] sm:$0xf]
      %v1759 = vld [vmem:[%s5 + $0x18] sm:$0xf]
      %v1760 = vld [vmem:[%s5 + $0x1c] sm:$0xf]
      %v1761 = vld [vmem:[%s5 + $0x20] sm:$0xf]
      %v1762 = vld [vmem:[%s5 + $0x24] sm:$0xf]
      %v1763 = vld [vmem:[%s5 + $0x28] sm:$0xf]
      %v1764 = vld [vmem:[%s5 + $0x2c] sm:$0xf]
      %v1765 = vld [vmem:[%s5 + $0x30] sm:$0xf]
      %v1766 = vld [vmem:[%s5 + $0x34] sm:$0xf]
      %v1767 = vld [vmem:[%s5 + $0x38] sm:$0xf]
      %v1768 = vld [vmem:[%s5 + $0x3c] sm:$0xf]
      %v1769 = vld [vmem:[%s5 + $0x40] sm:$0xf]
      %v1770 = vld [vmem:[%s5 + $0x44] sm:$0xf]
      %v1771 = vld [vmem:[%s5 + $0x48] sm:$0xf]
      %v1772 = vld [vmem:[%s5 + $0x4c] sm:$0xf]
      %v1773 = vld [vmem:[%s5 + $0x50] sm:$0xf]
      %v1774 = vld [vmem:[%s5 + $0x54] sm:$0xf]
      %v1775 = vld [vmem:[%s5 + $0x58] sm:$0xf]
      %v1776 = vld [vmem:[%s5 + $0x5c] sm:$0xf]
      %v1777 = vld [vmem:[%s5 + $0x60] sm:$0xf]
      %v1778 = vld [vmem:[%s5 + $0x64] sm:$0xf]
      %v1779 = vld [vmem:[%s5 + $0x68] sm:$0xf]
      %v1780 = vld [vmem:[%s5 + $0x6c] sm:$0xf]
      %v1781 = vld [vmem:[%s5 + $0x70] sm:$0xf]
      %v1782 = vld [vmem:[%s5 + $0x74] sm:$0xf]
      %v1783 = vld [vmem:[%s5 + $0x78] sm:$0xf]
      %v1784 = vld [vmem:[%s5 + $0x7c] sm:$0xf]
      %v1785 = vld [vmem:[%s5 + $0x80] sm:$0xf]
      %v1786 = vld [vmem:[%s5 + $0x84] sm:$0xf]
      %v1787 = vld [vmem:[%s5 + $0x88] sm:$0xf]
      %v1788 = vld [vmem:[%s5 + $0x8c] sm:$0xf]
      %v1789 = vld [vmem:[%s5 + $0x90] sm:$0xf]
      %v1790 = vld [vmem:[%s5 + $0x94] sm:$0xf]
      %v1791 = vld [vmem:[%s5 + $0x98] sm:$0xf]
      %v1792 = vld [vmem:[%s5 + $0x9c] sm:$0xf]
      %v1793 = vld [vmem:[%s5 + $0xa0] sm:$0xf]
      %v1794 = vld [vmem:[%s5 + $0xa4] sm:$0xf]
      %v1795 = vld [vmem:[%s5 + $0xa8] sm:$0xf]
      %v1796 = vld [vmem:[%s5 + $0xac] sm:$0xf]
      %v1797 = vld [vmem:[%s5 + $0xb0] sm:$0xf]
      %v1798 = vld [vmem:[%s5 + $0xb4] sm:$0xf]
      %v1799 = vld [vmem:[%s5 + $0xb8] sm:$0xf]
      %v1800 = vld [vmem:[%s5 + $0xbc] sm:$0xf]
      %v1801 = vld [vmem:[%s5 + $0xc0] sm:$0xf]
      %v1802 = vld [vmem:[%s5 + $0xc4] sm:$0xf]
      %v1803 = vld [vmem:[%s5 + $0xc8] sm:$0xf]
      %v1804 = vld [vmem:[%s5 + $0xcc] sm:$0xf]
      %v1805 = vld [vmem:[%s5 + $0xd0] sm:$0xf]
      %v1806 = vld [vmem:[%s5 + $0xd4] sm:$0xf]
      %v1807 = vld [vmem:[%s5 + $0xd8] sm:$0xf]
      %v1808 = vld [vmem:[%s5 + $0xdc] sm:$0xf]
      %v1809 = vld [vmem:[%s5 + $0xe0] sm:$0xf]
      %v1810 = vld [vmem:[%s5 + $0xe4] sm:$0xf]
      %v1811 = vld [vmem:[%s5 + $0xe8] sm:$0xf]
      %v1812 = vld [vmem:[%s5 + $0xec] sm:$0xf]
      %v1813 = vld [vmem:[%s5 + $0xf0] sm:$0xf]
      %v1814 = vld [vmem:[%s5 + $0xf4] sm:$0xf]
      %v1815 = vld [vmem:[%s5 + $0xf8] sm:$0xf]
      %v1816 = vld [vmem:[%s5 + $0xfc] sm:$0xf]
      %v1817 = vld [vmem:[%s6] sm:$0x1]
      %v1819 = vlaneseq
      %v1820 = vshrl.u32 %v1819, 7
      %v1821 = vsub.s32 0, %v1820
      %v1822 = vrot.slane %v1817, %v1821
      %v1888 = vunpack.c.l.b16 %v1753
      %v1889 = vunpack.c.l.b16 %v1754
      %v1890 = vunpack.c.l.b16 %v1755
      %v1891 = vunpack.c.l.b16 %v1756
      %v1892 = vunpack.c.l.b16 %v1757
      %v1893 = vunpack.c.l.b16 %v1758
      %v1894 = vunpack.c.l.b16 %v1759
      %v1895 = vunpack.c.l.b16 %v1760
      %v1896 = vunpack.c.l.b16 %v1761
      %v1897 = vunpack.c.l.b16 %v1762
      %v1898 = vunpack.c.l.b16 %v1763
      %v1899 = vunpack.c.l.b16 %v1764
      %v1900 = vunpack.c.l.b16 %v1765
      %v1901 = vunpack.c.l.b16 %v1766
      %v1902 = vunpack.c.l.b16 %v1767
      %v1903 = vunpack.c.l.b16 %v1768
      %v1904 = vunpack.c.l.b16 %v1769
      %v1905 = vunpack.c.l.b16 %v1770
      %v1906 = vunpack.c.l.b16 %v1771
      %v1907 = vunpack.c.l.b16 %v1772
      %v1908 = vunpack.c.l.b16 %v1773
      %v1909 = vunpack.c.l.b16 %v1774
      %v1910 = vunpack.c.l.b16 %v1775
      %v1911 = vunpack.c.l.b16 %v1776
      %v1912 = vunpack.c.l.b16 %v1777
      %v1913 = vunpack.c.l.b16 %v1778
      %v1914 = vunpack.c.l.b16 %v1779
      %v1915 = vunpack.c.l.b16 %v1780
      %v1916 = vunpack.c.l.b16 %v1781
      %v1917 = vunpack.c.l.b16 %v1782
      %v1918 = vunpack.c.l.b16 %v1783
      %v1919 = vunpack.c.l.b16 %v1784
      %v1920 = vunpack.c.l.b16 %v1785
      %v1921 = vunpack.c.l.b16 %v1786
      %v1922 = vunpack.c.l.b16 %v1787
      %v1923 = vunpack.c.l.b16 %v1788
      %v1924 = vunpack.c.l.b16 %v1789
      %v1925 = vunpack.c.l.b16 %v1790
      %v1926 = vunpack.c.l.b16 %v1791
      %v1927 = vunpack.c.l.b16 %v1792
      %v1928 = vunpack.c.l.b16 %v1793
      %v1929 = vunpack.c.l.b16 %v1794
      %v1930 = vunpack.c.l.b16 %v1795
      %v1931 = vunpack.c.l.b16 %v1796
      %v1932 = vunpack.c.l.b16 %v1797
      %v1933 = vunpack.c.l.b16 %v1798
      %v1934 = vunpack.c.l.b16 %v1799
      %v1935 = vunpack.c.l.b16 %v1800
      %v1936 = vunpack.c.l.b16 %v1801
      %v1937 = vunpack.c.l.b16 %v1802
      %v1938 = vunpack.c.l.b16 %v1803
      %v1939 = vunpack.c.l.b16 %v1804
      %v1940 = vunpack.c.l.b16 %v1805
      %v1941 = vunpack.c.l.b16 %v1806
      %v1942 = vunpack.c.l.b16 %v1807
      %v1943 = vunpack.c.l.b16 %v1808
      %v1944 = vunpack.c.l.b16 %v1809
      %v1945 = vunpack.c.l.b16 %v1810
      %v1946 = vunpack.c.l.b16 %v1811
      %v1947 = vunpack.c.l.b16 %v1812
      %v1948 = vunpack.c.l.b16 %v1813
      %v1949 = vunpack.c.l.b16 %v1814
      %v1950 = vunpack.c.l.b16 %v1815
      %v1951 = vunpack.c.l.b16 %v1816
      %v1952 = vpack.c.b16 %v1889, %v1888
      %v1953 = vpack.c.b16 %v1891, %v1890
      %v1954 = vpack.c.b16 %v1893, %v1892
      %v1955 = vpack.c.b16 %v1895, %v1894
      %v1956 = vpack.c.b16 %v1897, %v1896
      %v1957 = vpack.c.b16 %v1899, %v1898
      %v1958 = vpack.c.b16 %v1901, %v1900
      %v1959 = vpack.c.b16 %v1903, %v1902
      %v1960 = vpack.c.b16 %v1905, %v1904
      %v1961 = vpack.c.b16 %v1907, %v1906
      %v1962 = vpack.c.b16 %v1909, %v1908
      %v1963 = vpack.c.b16 %v1911, %v1910
      %v1964 = vpack.c.b16 %v1913, %v1912
      %v1965 = vpack.c.b16 %v1915, %v1914
      %v1966 = vpack.c.b16 %v1917, %v1916
      %v1967 = vpack.c.b16 %v1919, %v1918
      %v1968 = vpack.c.b16 %v1921, %v1920
      %v1969 = vpack.c.b16 %v1923, %v1922
      %v1970 = vpack.c.b16 %v1925, %v1924
      %v1971 = vpack.c.b16 %v1927, %v1926
      %v1972 = vpack.c.b16 %v1929, %v1928
      %v1973 = vpack.c.b16 %v1931, %v1930
      %v1974 = vpack.c.b16 %v1933, %v1932
      %v1975 = vpack.c.b16 %v1935, %v1934
      %v1976 = vpack.c.b16 %v1937, %v1936
      %v1977 = vpack.c.b16 %v1939, %v1938
      %v1978 = vpack.c.b16 %v1941, %v1940
      %v1979 = vpack.c.b16 %v1943, %v1942
      %v1980 = vpack.c.b16 %v1945, %v1944
      %v1981 = vpack.c.b16 %v1947, %v1946
      %v1982 = vpack.c.b16 %v1949, %v1948
      %v1983 = vpack.c.b16 %v1951, %v1950
      %2016 = vmatprep.subr.bf16.mxu0 0
      %2017 = vmatpush1.bf16.msra.mxu0 %v1959
      %2018 = vmatprep.subr.bf16.mxu0 0
      %2019 = vmatpush1.bf16.msra.mxu0 %v1958
      %2020 = vmatprep.subr.bf16.mxu0 0
      %2021 = vmatpush1.bf16.msra.mxu0 %v1957
      %2022 = vmatprep.subr.bf16.mxu0 0
      %2023 = vmatpush1.bf16.msra.mxu0 %v1956
      %2024 = vmatprep.subr.bf16.mxu0 0
      %2025 = vmatpush1.bf16.msra.mxu0 %v1955
      %2026 = vmatprep.subr.bf16.mxu0 0
      %2027 = vmatpush1.bf16.msra.mxu0 %v1954
      %2028 = vmatprep.subr.bf16.mxu0 0
      %2029 = vmatpush1.bf16.msra.mxu0 %v1953
      %2030 = vmatprep.subr.bf16.mxu0 0
      %2031 = vmatpush1.bf16.msra.mxu0 %v1952
      %2032 = vmatprep.subr.bf16.mxu0 0
      %2033 = vmatpush2.bf16.msra.mxu0 %v1967
      %2034 = vmatprep.subr.bf16.mxu0 0
      %2035 = vmatpush2.bf16.msra.mxu0 %v1966
      %2036 = vmatprep.subr.bf16.mxu0 0
      %2037 = vmatpush2.bf16.msra.mxu0 %v1965
      %2038 = vmatprep.subr.bf16.mxu0 0
      %2039 = vmatpush2.bf16.msra.mxu0 %v1964
      %2040 = vmatprep.subr.bf16.mxu0 0
      %2041 = vmatpush2.bf16.msra.mxu0 %v1963
      %2042 = vmatprep.subr.bf16.mxu0 0
      %2043 = vmatpush2.bf16.msra.mxu0 %v1962
      %2044 = vmatprep.subr.bf16.mxu0 0
      %2045 = vmatpush2.bf16.msra.mxu0 %v1961
      %2046 = vmatprep.subr.bf16.mxu0 0
      %2047 = vmatpush2.bf16.msra.mxu0 %v1960
      %2048 = vmatprep.mubr.bf16.mxu0 %v1690
      %2049 = vmatmul.mubr.bf16.gmra.mxu0 %v1689
      %v2050 = vpop.f32.mrf.mxu0
      %v2051 = vadd.f32 %v1822, %v2050
      %v2052 = vpop.f32.mrf.mxu0
      %v2053 = vpop.f32.mrf.mxu0
      %v2054 = vadd.f32 %v1822, %v2053
      %v2055 = vpop.f32.mrf.mxu0
      %2056 = vmatprep.mubr.bf16.mxu0 %v1694
      %2057 = vmatmul.mubr.bf16.gmra.mxu0 %v1693
      %v2058 = vpop.f32.mrf.mxu0
      %v2059 = vadd.f32 %v1822, %v2058
      %v2060 = vpop.f32.mrf.mxu0
      %v2061 = vpop.f32.mrf.mxu0
      %v2062 = vadd.f32 %v1822, %v2061
      %v2063 = vpop.f32.mrf.mxu0
      %2064 = vmatprep.mubr.bf16.mxu0 %v1698
      %2065 = vmatmul.mubr.bf16.gmra.mxu0 %v1697
      %v2066 = vpop.f32.mrf.mxu0
      %v2067 = vadd.f32 %v1822, %v2066
      %v2068 = vpop.f32.mrf.mxu0
      %v2069 = vpop.f32.mrf.mxu0
      %v2070 = vadd.f32 %v1822, %v2069
      %v2071 = vpop.f32.mrf.mxu0
      %2072 = vmatprep.mubr.bf16.mxu0 %v1702
      %2073 = vmatmul.mubr.bf16.gmra.mxu0 %v1701
      %v2074 = vpop.f32.mrf.mxu0
      %v2075 = vadd.f32 %v1822, %v2074
      %v2076 = vpop.f32.mrf.mxu0
      %v2077 = vpop.f32.mrf.mxu0
      %v2078 = vadd.f32 %v1822, %v2077
      %v2079 = vpop.f32.mrf.mxu0
      %2080 = vmatprep.mubr.bf16.mxu0 %v1706
      %2081 = vmatmul.mubr.bf16.gmra.mxu0 %v1705
      %v2082 = vpop.f32.mrf.mxu0
      %v2083 = vadd.f32 %v1822, %v2082
      %v2084 = vpop.f32.mrf.mxu0
      %v2085 = vpop.f32.mrf.mxu0
      %v2086 = vadd.f32 %v1822, %v2085
      %v2087 = vpop.f32.mrf.mxu0
      %2088 = vmatprep.mubr.bf16.mxu0 %v1710
      %2089 = vmatmul.mubr.bf16.gmra.mxu0 %v1709
      %v2090 = vpop.f32.mrf.mxu0
      %v2091 = vadd.f32 %v1822, %v2090
      %v2092 = vpop.f32.mrf.mxu0
      %v2093 = vpop.f32.mrf.mxu0
      %v2094 = vadd.f32 %v1822, %v2093
      %v2095 = vpop.f32.mrf.mxu0
      %2096 = vmatprep.mubr.bf16.mxu0 %v1714
      %2097 = vmatmul.mubr.bf16.gmra.mxu0 %v1713
      %v2098 = vpop.f32.mrf.mxu0
      %v2099 = vadd.f32 %v1822, %v2098
      %v2100 = vpop.f32.mrf.mxu0
      %v2101 = vpop.f32.mrf.mxu0
      %v2102 = vadd.f32 %v1822, %v2101
      %v2103 = vpop.f32.mrf.mxu0
      %2104 = vmatprep.mubr.bf16.mxu0 %v1718
      %2105 = vmatmul.mubr.bf16.gmra.mxu0 %v1717
      %v2106 = vpop.f32.mrf.mxu0
      %v2107 = vadd.f32 %v1822, %v2106
      %v2108 = vpop.f32.mrf.mxu0
      %v2109 = vpop.f32.mrf.mxu0
      %v2110 = vadd.f32 %v1822, %v2109
      %v2111 = vpop.f32.mrf.mxu0
      %2112 = vmatprep.mubr.bf16.mxu0 %v1722
      %2113 = vmatmul.mubr.bf16.gmra.mxu0 %v1721
      %v2114 = vpop.f32.mrf.mxu0
      %v2115 = vadd.f32 %v1822, %v2114
      %v2116 = vpop.f32.mrf.mxu0
      %v2117 = vpop.f32.mrf.mxu0
      %v2118 = vadd.f32 %v1822, %v2117
      %v2119 = vpop.f32.mrf.mxu0
      %2120 = vmatprep.mubr.bf16.mxu0 %v1726
      %2121 = vmatmul.mubr.bf16.gmra.mxu0 %v1725
      %v2122 = vpop.f32.mrf.mxu0
      %v2123 = vadd.f32 %v1822, %v2122
      %v2124 = vpop.f32.mrf.mxu0
      %v2125 = vpop.f32.mrf.mxu0
      %v2126 = vadd.f32 %v1822, %v2125
      %v2127 = vpop.f32.mrf.mxu0
      %2128 = vmatprep.mubr.bf16.mxu0 %v1730
      %2129 = vmatmul.mubr.bf16.gmra.mxu0 %v1729
      %v2130 = vpop.f32.mrf.mxu0
      %v2131 = vadd.f32 %v1822, %v2130
      %v2132 = vpop.f32.mrf.mxu0
      %v2133 = vpop.f32.mrf.mxu0
      %v2134 = vadd.f32 %v1822, %v2133
      %v2135 = vpop.f32.mrf.mxu0
      %2136 = vmatprep.mubr.bf16.mxu0 %v1734
      %2137 = vmatmul.mubr.bf16.gmra.mxu0 %v1733
      %v2138 = vpop.f32.mrf.mxu0
      %v2139 = vadd.f32 %v1822, %v2138
      %v2140 = vpop.f32.mrf.mxu0
      %v2141 = vpop.f32.mrf.mxu0
      %v2142 = vadd.f32 %v1822, %v2141
      %v2143 = vpop.f32.mrf.mxu0
      %2144 = vmatprep.mubr.bf16.mxu0 %v1738
      %2145 = vmatmul.mubr.bf16.gmra.mxu0 %v1737
      %v2146 = vpop.f32.mrf.mxu0
      %v2147 = vadd.f32 %v1822, %v2146
      %v2148 = vpop.f32.mrf.mxu0
      %v2149 = vpop.f32.mrf.mxu0
      %v2150 = vadd.f32 %v1822, %v2149
      %v2151 = vpop.f32.mrf.mxu0
      %2152 = vmatprep.mubr.bf16.mxu0 %v1742
      %2153 = vmatmul.mubr.bf16.gmra.mxu0 %v1741
      %v2154 = vpop.f32.mrf.mxu0
      %v2155 = vadd.f32 %v1822, %v2154
      %v2156 = vpop.f32.mrf.mxu0
      %v2157 = vpop.f32.mrf.mxu0
      %v2158 = vadd.f32 %v1822, %v2157
      %v2159 = vpop.f32.mrf.mxu0
      %2160 = vmatprep.mubr.bf16.mxu0 %v1746
      %2161 = vmatmul.mubr.bf16.gmra.mxu0 %v1745
      %v2162 = vpop.f32.mrf.mxu0
      %v2163 = vadd.f32 %v1822, %v2162
      %v2164 = vpop.f32.mrf.mxu0
      %v2165 = vpop.f32.mrf.mxu0
      %v2166 = vadd.f32 %v1822, %v2165
      %v2167 = vpop.f32.mrf.mxu0
      %2168 = vmatprep.mubr.bf16.mxu0 %v1750
      %2169 = vmatmul.mubr.bf16.gmra.mxu0 %v1749
      %v2170 = vpop.f32.mrf.mxu0
      %v2171 = vadd.f32 %v1822, %v2170
      %v2172 = vpop.f32.mrf.mxu0
      %v2173 = vpop.f32.mrf.mxu0
      %v2174 = vadd.f32 %v1822, %v2173
      %v2175 = vpop.f32.mrf.mxu0
      %2176 = vdwg.mxu0
      %2177 = vmatprep.subr.bf16.mxu0 0
      %2178 = vmatpush1.bf16.msra.mxu0 %v1975
      %2179 = vmatprep.subr.bf16.mxu0 0
      %2180 = vmatpush1.bf16.msra.mxu0 %v1974
      %2181 = vmatprep.subr.bf16.mxu0 0
      %2182 = vmatpush1.bf16.msra.mxu0 %v1973
      %2183 = vmatprep.subr.bf16.mxu0 0
      %2184 = vmatpush1.bf16.msra.mxu0 %v1972
      %2185 = vmatprep.subr.bf16.mxu0 0
      %2186 = vmatpush1.bf16.msra.mxu0 %v1971
      %2187 = vmatprep.subr.bf16.mxu0 0
      %2188 = vmatpush1.bf16.msra.mxu0 %v1970
      %2189 = vmatprep.subr.bf16.mxu0 0
      %2190 = vmatpush1.bf16.msra.mxu0 %v1969
      %2191 = vmatprep.subr.bf16.mxu0 0
      %2192 = vmatpush1.bf16.msra.mxu0 %v1968
      %2193 = vmatprep.subr.bf16.mxu0 0
      %2194 = vmatpush2.bf16.msra.mxu0 %v1983
      %2195 = vmatprep.subr.bf16.mxu0 0
      %2196 = vmatpush2.bf16.msra.mxu0 %v1982
      %2197 = vmatprep.subr.bf16.mxu0 0
      %2198 = vmatpush2.bf16.msra.mxu0 %v1981
      %2199 = vmatprep.subr.bf16.mxu0 0
      %2200 = vmatpush2.bf16.msra.mxu0 %v1980
      %2201 = vmatprep.subr.bf16.mxu0 0
      %2202 = vmatpush2.bf16.msra.mxu0 %v1979
      %2203 = vmatprep.subr.bf16.mxu0 0
      %2204 = vmatpush2.bf16.msra.mxu0 %v1978
      %2205 = vmatprep.subr.bf16.mxu0 0
      %2206 = vmatpush2.bf16.msra.mxu0 %v1977
      %2207 = vmatprep.subr.bf16.mxu0 0
      %2208 = vmatpush2.bf16.msra.mxu0 %v1976
      %2209 = vmatprep.mubr.bf16.mxu0 %v1692
      %2210 = vmatmul.mubr.bf16.gmra.mxu0 %v1691
      %v2211 = vpop.f32.mrf.mxu0
      %v2212 = vadd.f32 %v2051, %v2211
      %v2213 = vpop.f32.mrf.mxu0
      %v2214 = vpop.f32.mrf.mxu0
      %v2215 = vadd.f32 %v2054, %v2214
      %v2216 = vpop.f32.mrf.mxu0
      %2217 = vmatprep.mubr.bf16.mxu0 %v1696
      %2218 = vmatmul.mubr.bf16.gmra.mxu0 %v1695
      %v2219 = vpop.f32.mrf.mxu0
      %v2220 = vadd.f32 %v2059, %v2219
      %v2221 = vpop.f32.mrf.mxu0
      %v2222 = vpop.f32.mrf.mxu0
      %v2223 = vadd.f32 %v2062, %v2222
      %v2224 = vpop.f32.mrf.mxu0
      %2225 = vmatprep.mubr.bf16.mxu0 %v1700
      %2226 = vmatmul.mubr.bf16.gmra.mxu0 %v1699
      %v2227 = vpop.f32.mrf.mxu0
      %v2228 = vadd.f32 %v2067, %v2227
      %v2229 = vpop.f32.mrf.mxu0
      %v2230 = vpop.f32.mrf.mxu0
      %v2231 = vadd.f32 %v2070, %v2230
      %v2232 = vpop.f32.mrf.mxu0
      %2233 = vmatprep.mubr.bf16.mxu0 %v1704
      %2234 = vmatmul.mubr.bf16.gmra.mxu0 %v1703
      %v2235 = vpop.f32.mrf.mxu0
      %v2236 = vadd.f32 %v2075, %v2235
      %v2237 = vpop.f32.mrf.mxu0
      %v2238 = vpop.f32.mrf.mxu0
      %v2239 = vadd.f32 %v2078, %v2238
      %v2240 = vpop.f32.mrf.mxu0
      %2241 = vmatprep.mubr.bf16.mxu0 %v1708
      %2242 = vmatmul.mubr.bf16.gmra.mxu0 %v1707
      %v2243 = vpop.f32.mrf.mxu0
      %v2244 = vadd.f32 %v2083, %v2243
      %v2245 = vpop.f32.mrf.mxu0
      %v2246 = vpop.f32.mrf.mxu0
      %v2247 = vadd.f32 %v2086, %v2246
      %v2248 = vpop.f32.mrf.mxu0
      %2249 = vmatprep.mubr.bf16.mxu0 %v1712
      %2250 = vmatmul.mubr.bf16.gmra.mxu0 %v1711
      %v2251 = vpop.f32.mrf.mxu0
      %v2252 = vadd.f32 %v2091, %v2251
      %v2253 = vpop.f32.mrf.mxu0
      %v2254 = vpop.f32.mrf.mxu0
      %v2255 = vadd.f32 %v2094, %v2254
      %v2256 = vpop.f32.mrf.mxu0
      %2257 = vmatprep.mubr.bf16.mxu0 %v1716
      %2258 = vmatmul.mubr.bf16.gmra.mxu0 %v1715
      %v2259 = vpop.f32.mrf.mxu0
      %v2260 = vadd.f32 %v2099, %v2259
      %v2261 = vpop.f32.mrf.mxu0
      %v2262 = vpop.f32.mrf.mxu0
      %v2263 = vadd.f32 %v2102, %v2262
      %v2264 = vpop.f32.mrf.mxu0
      %2265 = vmatprep.mubr.bf16.mxu0 %v1720
      %2266 = vmatmul.mubr.bf16.gmra.mxu0 %v1719
      %v2267 = vpop.f32.mrf.mxu0
      %v2268 = vadd.f32 %v2107, %v2267
      %v2269 = vpop.f32.mrf.mxu0
      %v2270 = vpop.f32.mrf.mxu0
      %v2271 = vadd.f32 %v2110, %v2270
      %v2272 = vpop.f32.mrf.mxu0
      %2273 = vmatprep.mubr.bf16.mxu0 %v1724
      %2274 = vmatmul.mubr.bf16.gmra.mxu0 %v1723
      %v2275 = vpop.f32.mrf.mxu0
      %v2276 = vadd.f32 %v2115, %v2275
      %v2277 = vpop.f32.mrf.mxu0
      %v2278 = vpop.f32.mrf.mxu0
      %v2279 = vadd.f32 %v2118, %v2278
      %v2280 = vpop.f32.mrf.mxu0
      %2281 = vmatprep.mubr.bf16.mxu0 %v1728
      %2282 = vmatmul.mubr.bf16.gmra.mxu0 %v1727
      %v2283 = vpop.f32.mrf.mxu0
      %v2284 = vadd.f32 %v2123, %v2283
      %v2285 = vpop.f32.mrf.mxu0
      %v2286 = vpop.f32.mrf.mxu0
      %v2287 = vadd.f32 %v2126, %v2286
      %v2288 = vpop.f32.mrf.mxu0
      %2289 = vmatprep.mubr.bf16.mxu0 %v1732
      %2290 = vmatmul.mubr.bf16.gmra.mxu0 %v1731
      %v2291 = vpop.f32.mrf.mxu0
      %v2292 = vadd.f32 %v2131, %v2291
      %v2293 = vpop.f32.mrf.mxu0
      %v2294 = vpop.f32.mrf.mxu0
      %v2295 = vadd.f32 %v2134, %v2294
      %v2296 = vpop.f32.mrf.mxu0
      %2297 = vmatprep.mubr.bf16.mxu0 %v1736
      %2298 = vmatmul.mubr.bf16.gmra.mxu0 %v1735
      %v2299 = vpop.f32.mrf.mxu0
      %v2300 = vadd.f32 %v2139, %v2299
      %v2301 = vpop.f32.mrf.mxu0
      %v2302 = vpop.f32.mrf.mxu0
      %v2303 = vadd.f32 %v2142, %v2302
      %v2304 = vpop.f32.mrf.mxu0
      %2305 = vmatprep.mubr.bf16.mxu0 %v1740
      %2306 = vmatmul.mubr.bf16.gmra.mxu0 %v1739
      %v2307 = vpop.f32.mrf.mxu0
      %v2308 = vadd.f32 %v2147, %v2307
      %v2309 = vpop.f32.mrf.mxu0
      %v2310 = vpop.f32.mrf.mxu0
      %v2311 = vadd.f32 %v2150, %v2310
      %v2312 = vpop.f32.mrf.mxu0
      %2313 = vmatprep.mubr.bf16.mxu0 %v1744
      %2314 = vmatmul.mubr.bf16.gmra.mxu0 %v1743
      %v2315 = vpop.f32.mrf.mxu0
      %v2316 = vadd.f32 %v2155, %v2315
      %v2317 = vpop.f32.mrf.mxu0
      %v2318 = vpop.f32.mrf.mxu0
      %v2319 = vadd.f32 %v2158, %v2318
      %v2320 = vpop.f32.mrf.mxu0
      %2321 = vmatprep.mubr.bf16.mxu0 %v1748
      %2322 = vmatmul.mubr.bf16.gmra.mxu0 %v1747
      %v2323 = vpop.f32.mrf.mxu0
      %v2324 = vadd.f32 %v2163, %v2323
      %v2325 = vpop.f32.mrf.mxu0
      %v2326 = vpop.f32.mrf.mxu0
      %v2327 = vadd.f32 %v2166, %v2326
      %v2328 = vpop.f32.mrf.mxu0
      %2329 = vmatprep.mubr.bf16.mxu0 %v1752
      %2330 = vmatmul.mubr.bf16.gmra.mxu0 %v1751
      %v2331 = vpop.f32.mrf.mxu0
      %v2332 = vadd.f32 %v2171, %v2331
      %v2333 = vpop.f32.mrf.mxu0
      %v2334 = vpop.f32.mrf.mxu0
      %v2335 = vadd.f32 %v2174, %v2334
      %v2336 = vpop.f32.mrf.mxu0
      %2337 = vdwg.mxu0
      %2338 = vst [vmem:[%s280] sm:$0xff] %v2212
      %2339 = vst [vmem:[%s280 + $0x8] sm:$0xff] %v2215
      %2340 = vst [vmem:[%s280 + $0x10] sm:$0xff] %v2220
      %2341 = vst [vmem:[%s280 + $0x18] sm:$0xff] %v2223
      %2342 = vst [vmem:[%s280 + $0x20] sm:$0xff] %v2228
      %2343 = vst [vmem:[%s280 + $0x28] sm:$0xff] %v2231
      %2344 = vst [vmem:[%s280 + $0x30] sm:$0xff] %v2236
      %2345 = vst [vmem:[%s280 + $0x38] sm:$0xff] %v2239
      %2346 = vst [vmem:[%s280 + $0x40] sm:$0xff] %v2244
      %2347 = vst [vmem:[%s280 + $0x48] sm:$0xff] %v2247
      %2348 = vst [vmem:[%s280 + $0x50] sm:$0xff] %v2252
      %2349 = vst [vmem:[%s280 + $0x58] sm:$0xff] %v2255
      %2350 = vst [vmem:[%s280 + $0x60] sm:$0xff] %v2260
      %2351 = vst [vmem:[%s280 + $0x68] sm:$0xff] %v2263
      %2352 = vst [vmem:[%s280 + $0x70] sm:$0xff] %v2268
      %2353 = vst [vmem:[%s280 + $0x78] sm:$0xff] %v2271
      %2354 = vst [vmem:[%s280 + $0x80] sm:$0xff] %v2276
      %2355 = vst [vmem:[%s280 + $0x88] sm:$0xff] %v2279
      %2356 = vst [vmem:[%s280 + $0x90] sm:$0xff] %v2284
      %2357 = vst [vmem:[%s280 + $0x98] sm:$0xff] %v2287
      %2358 = vst [vmem:[%s280 + $0xa0] sm:$0xff] %v2292
      %2359 = vst [vmem:[%s280 + $0xa8] sm:$0xff] %v2295
      %2360 = vst [vmem:[%s280 + $0xb0] sm:$0xff] %v2300
      %2361 = vst [vmem:[%s280 + $0xb8] sm:$0xff] %v2303
      %2362 = vst [vmem:[%s280 + $0xc0] sm:$0xff] %v2308
      %2363 = vst [vmem:[%s280 + $0xc8] sm:$0xff] %v2311
      %2364 = vst [vmem:[%s280 + $0xd0] sm:$0xff] %v2316
      %2365 = vst [vmem:[%s280 + $0xd8] sm:$0xff] %v2319
      %2366 = vst [vmem:[%s280 + $0xe0] sm:$0xff] %v2324
      %2367 = vst [vmem:[%s280 + $0xe8] sm:$0xff] %v2327
      %2368 = vst [vmem:[%s280 + $0xf0] sm:$0xff] %v2332
      %2369 = vst [vmem:[%s280 + $0xf8] sm:$0xff] %v2335
      %s2370 = smul.u32 32, %s18
      %p2371 = scmp.lt.s32.totalorder %s2370, 63
      %s2372 = scalar_select %p2371, %s2370, 63
      %s2373 = smul.addr %s2372, 8
      %s2374 = scalar_lea.vmem %s7, %s2373
      // Predicated region
      $region49: #{densenet_tabular_forward.1} parent=47 // pred_check
        %p2375 = pneg %p188
      $region50: #{densenet_tabular_forward.1} parent=47 // pred_check_branch
        %2377 = sbr.rel (%p2375) target = $region52
      $region51: #{densenet_tabular_forward.1} parent=47 // pred_region
        %s2378 = smul.u32 32, %s18
      $region52: #{densenet_tabular_forward.1} parent=47 // pred_fallthru
        _
    $region48: #{densenet_tabular_forward.1} parent=5 // pred_fallthru
      _
    %p2379 = scmp.le.s32.totalorder 2, %s13
    // Predicated region
    $region53: #{densenet_tabular_forward.1} parent=5 // pred_check
      %p2380 = pneg %p2379
    $region54: #{densenet_tabular_forward.1} parent=5 // pred_check_branch
      %2382 = sbr.rel (%p2380) target = $region56
    $region55: #{densenet_tabular_forward.1} parent=5 // pred_region
      %s2383 = ssub.s32 %s13, 2
      // Predicated region
      $region57: #{densenet_tabular_forward.1} parent=55 // pred_check
        %p2384 = pneg %p194
      $region58: #{densenet_tabular_forward.1} parent=55 // pred_check_branch
        %2386 = sbr.rel (%p2384) target = $region60
      $region59: #{densenet_tabular_forward.1} parent=55 // pred_region
        %s2387 = smul.u32 32, %s19
        %p2388 = scmp.lt.s32.totalorder %s2387, 63
        %s2389 = scalar_select %p2388, %s2387, 63
        %s2390 = smul.addr %s2389, 8
        %s2391 = scalar_lea.vmem %s7, %s2390
      $region60: #{densenet_tabular_forward.1} parent=55 // pred_fallthru
        _
    $region56: #{densenet_tabular_forward.1} parent=5 // pred_fallthru
      _
  $region6: #{densenet_tabular_forward.1} parent=0 // loop_footer
    %s17 = sadd.s32 1, %s13
  $region7: #{densenet_tabular_forward.1} parent=0 // loop_footer_branch
    %12 = sbr.rel target = $region3
  $region8: #{densenet_tabular_forward.1} parent=0 // loop_exit
    _

</llo_original>
